<compile_context>
chip_gen: v6e
topology: v6e:2x2x1
jax: 0.10.0
libtpu: 0.0.40
codegen_flags: <defaults>
</compile_context>

<pallas_src>
import math
from fractions import Fraction

import numpy as np
import jax
import jax.numpy as jnp
from jax.experimental import pallas as pl
from jax.experimental.pallas import tpu as pltpu


# ---------------------------------------------------------------------------
# Minimal e3nn-style irrep machinery + real Wigner 3j (host side, numpy).
# Reproduces o3.wigner_3j / _wigner_nj / U_matrix_real used to build the static
# U buffers of `Contraction` (init-time parameter setup, as in the torch code).
# ---------------------------------------------------------------------------
class Irrep:
    def __init__(self, l, p):
        self.l = int(l)
        self.p = int(p)

    @property
    def dim(self):
        return 2 * self.l + 1

    def __eq__(self, other):
        return (self.l, self.p) == (other.l, other.p)

    def __hash__(self):
        return hash((self.l, self.p))

    def sort_key(self):
        # e3nn ordering: 0e < 0o < 1o < 1e < 2e < 2o < ...
        return (self.l, -self.p * (-1) ** self.l)

    def __mul__(self, other):
        p = self.p * other.p
        return [Irrep(l, p) for l in range(abs(self.l - other.l), self.l + other.l + 1)]


def irreps_dim(irreps):
    return sum(mul * ir.dim for mul, ir in irreps)


def _su2_cg_coeff(idx1, idx2, idx3):
    j1, m1 = idx1
    j2, m2 = idx2
    j3, m3 = idx3
    if m3 != m1 + m2:
        return 0.0

    def f(n):
        return math.factorial(round(n))

    vmin = int(max([-j1 + j2 + m3, -j1 + m1, 0]))
    vmax = int(min([j2 + j3 + m1, j3 - j1 + j2, j3 + m3]))
    C = ((2.0 * j3 + 1.0) * Fraction(
        f(j3 + j1 - j2) * f(j3 - j1 + j2) * f(j1 + j2 - j3) * f(j3 + m3) * f(j3 - m3),
        f(j1 + j2 + j3 + 1) * f(j1 - m1) * f(j1 + m1) * f(j2 - m2) * f(j2 + m2),
    )) ** 0.5
    S = 0
    for v in range(vmin, vmax + 1):
        S += (-1) ** int(v + j2 + m2) * Fraction(
            f(j2 + j3 + m1 - v) * f(j1 - m1 + v),
            f(v) * f(j3 - j1 + j2 - v) * f(j3 + m3 - v) * f(v + j1 - j2 - m3),
        )
    return float(C * S)


def _su2_cg(j1, j2, j3):
    mat = np.zeros((2 * j1 + 1, 2 * j2 + 1, 2 * j3 + 1), dtype=np.float64)
    if 2 * j3 in range(int(2 * abs(j1 - j2)), int(2 * (j1 + j2)) + 1, 2):
        for m1 in range(-j1, j1 + 1):
            for m2 in range(-j2, j2 + 1):
                if abs(m1 + m2) <= j3:
                    mat[j1 + m1, j2 + m2, j3 + m1 + m2] = _su2_cg_coeff(
                        (j1, m1), (j2, m2), (j3, m1 + m2))
    return mat


def _change_basis_real_to_complex(l):
    q = np.zeros((2 * l + 1, 2 * l + 1), dtype=np.complex128)
    for m in range(-l, 0):
        q[l + m, l + abs(m)] = 1 / 2 ** 0.5
        q[l + m, l - abs(m)] = -1j / 2 ** 0.5
    q[l, l] = 1
    for m in range(1, l + 1):
        q[l + m, l + abs(m)] = (-1) ** m / 2 ** 0.5
        q[l + m, l - abs(m)] = 1j * (-1) ** m / 2 ** 0.5
    return (-1j) ** l * q


def wigner_3j(l1, l2, l3):
    Q1 = _change_basis_real_to_complex(l1)
    Q2 = _change_basis_real_to_complex(l2)
    Q3 = _change_basis_real_to_complex(l3)
    C = _su2_cg(l1, l2, l3).astype(np.complex128)
    C = np.einsum("ij,kl,mn,ikn->jlm", Q1, Q2, np.conj(Q3.T), C)
    assert np.abs(C.imag).max() < 1e-6
    C = C.real
    n = np.linalg.norm(C)
    return C / n if n > 0 else C


def _wigner_nj(irrepss, normalization="component"):
    if len(irrepss) == 1:
        irreps = irrepss[0]
        ret = []
        e = np.eye(irreps_dim(irreps))
        i = 0
        for mul, ir in irreps:
            for _ in range(mul):
                ret.append((ir, e[i:i + ir.dim]))
                i += ir.dim
        return ret
    *irrepss_left, irreps_right = irrepss
    dims_left = [irreps_dim(ii) for ii in irrepss_left]
    ret = []
    for ir_left, C_left in _wigner_nj(irrepss_left, normalization):
        i = 0
        for mul, ir in irreps_right:
            for ir_out in ir_left * ir:
                C = wigner_3j(ir_out.l, ir_left.l, ir.l)
                if normalization == "component":
                    C = C * ir_out.dim ** 0.5
                C = np.einsum("jk,ijl->ikl", C_left.reshape(C_left.shape[0], -1), C)
                C = C.reshape(ir_out.dim, *dims_left, ir.dim)
                for u in range(mul):
                    Emat = np.zeros((ir_out.dim, *dims_left, irreps_dim(irreps_right)))
                    sl = slice(i + u * ir.dim, i + (u + 1) * ir.dim)
                    Emat[..., sl] = C
                    ret.append((ir_out, Emat))
            i += mul * ir.dim
    return sorted(ret, key=lambda t: t[0].sort_key())


def u_matrix(coupling_irreps, target_ir, correlation):
    """Equivalent of U_matrix_real(...)[-1] for a single target irrep."""
    wigners = _wigner_nj([coupling_irreps] * correlation)
    bases = [np.squeeze(b)[..., None] for ir, b in wigners if ir == target_ir]
    return np.concatenate(bases, axis=-1)


# ---------------------------------------------------------------------------
# Block configuration: EquivariantProductBasisBlock(
#     node_feats_irreps="4x0e+4x1o", target_irreps="4x0e+4x1o",
#     correlation=3, use_sc=True, num_elements=3)
# ---------------------------------------------------------------------------
NODE_FEATS_IRREPS = [(4, Irrep(0, 1)), (4, Irrep(1, -1))]
TARGET_IRREPS = [(4, Irrep(0, 1)), (4, Irrep(1, -1))]
CORRELATION = 3
NUM_ELEMENTS = 3
USE_SC = True

C = NODE_FEATS_IRREPS[0][0]                       # num_features (mult of 0e) = 4
COUPLING = [(1, ir) for _, ir in NODE_FEATS_IRREPS]
ELL = irreps_dim(COUPLING)                        # coupled irrep dim = 4
E = NUM_ELEMENTS
OUT_DIMS = [ir.dim for _, ir in TARGET_IRREPS]    # [1, 3]
TOFF = [0]
for _d in OUT_DIMS[:-1]:
    TOFF.append(TOFF[-1] + _d)                    # offset of each target in a 4-row pack
DSUM = sum(OUT_DIMS)                              # 4
P = C * DSUM                                      # 16 packed rows (= 2 f32 vregs)
D_TOTAL = sum(mul * ir.dim for mul, ir in TARGET_IRREPS)    # 16
PATH_W = 1.0 / math.sqrt(C)                       # o3.Linear "element" path norm

LEVEL_ROWS = [ELL ** nu * P for nu in range(1, CORRELATION + 1)]   # [64, 256, 1024]
LEVEL_OFF = [0]
for _r in LEVEL_ROWS[:-1]:
    LEVEL_OFF.append(LEVEL_OFF[-1] + _r)                            # [0, 64, 320]
R_ALL = sum(LEVEL_ROWS)                                             # 1344
TILE_REPS = ELL ** (CORRELATION - 1)                                # 16

N = 512                                           # number of nodes
BN = 256                                          # nodes per grid step (lanes); grid = 2


# ---------------------------------------------------------------------------
# Deterministic synthetic parameters (same shapes as the torch module).
# ---------------------------------------------------------------------------
def init_params(key):
    params = []
    for mul, ir in TARGET_IRREPS:
        u_list, w_list = [], []
        for nu in range(1, CORRELATION + 1):
            U = u_matrix(COUPLING, ir, nu)                     # float64 buffer
            K = U.shape[-1]
            key, sub = jax.random.split(key)
            W = jax.random.normal(sub, (E, K, C), jnp.float32) / K
            u_list.append(U)
            w_list.append(np.asarray(W, dtype=np.float64))
        key, sub = jax.random.split(key)
        w_lin = np.asarray(jax.random.normal(sub, (mul, mul), jnp.float32),
                           dtype=np.float64)
        params.append(dict(ir=ir, U=u_list, W=w_list, W_lin=w_lin))
    return params


def build_kernel_constants(params):
    """Pre-contract V[e,...,c] = sum_k U[...,k] W[e,k,c] host-side (exact fp64),
    pack every correlation level / target irrep / channel into ONE (R_ALL, E)
    buffer whose rows are ordered (i_nu, ..., i_1, channel, target, d) so the
    in-kernel chain runs on 8-aligned slabs, and fold the o3.Linear (with path
    normalization and the packed->output row reorder) into a (D_TOTAL, P)
    mixing matrix."""
    v_all = np.zeros((R_ALL, E), dtype=np.float64)

    for nu in range(1, CORRELATION + 1):
        lvl = np.zeros((E, ELL ** nu, P), dtype=np.float64)
        for t, (prm, (mul, ir)) in enumerate(zip(params, TARGET_IRREPS)):
            d = ir.dim
            U, W = prm["U"][nu - 1], prm["W"][nu - 1]
            V = np.einsum("...k,ekc->e...c", U, W)            # (E,[d],ELL^nu dims,C)
            V = V.reshape(E, d, *([ELL] * nu), C)             # explicit d axis
            # (e, d, i1..i_nu, c) -> (e, i_nu..i_1, c, d)
            perm = (0,) + tuple(range(nu + 1, 1, -1)) + (nu + 2, 1)
            Vp = np.transpose(V, perm).reshape(E, ELL ** nu, C, d)
            for c in range(C):
                col = c * DSUM + TOFF[t]
                lvl[:, :, col:col + d] = Vp[:, :, c, :]
        off = LEVEL_OFF[nu - 1]
        v_all[off:off + ELL ** nu * P, :] = (
            lvl.transpose(1, 2, 0).reshape(ELL ** nu * P, E))

    # o3.Linear as a (D_TOTAL, P) matrix on the packed rows; also performs the
    # (c, t, d)-packed -> (t, w, d)-concatenated output reordering.
    m_lin = np.zeros((D_TOTAL, P), dtype=np.float64)
    row0 = 0
    for t, (prm, (mul, ir)) in enumerate(zip(params, TARGET_IRREPS)):
        d = ir.dim
        for w in range(mul):
            for u in range(C):
                for dd in range(d):
                    m_lin[row0 + w * d + dd, u * DSUM + TOFF[t] + dd] = (
                        PATH_W * prm["W_lin"][u, w])
        row0 += mul * d

    return jnp.asarray(v_all, jnp.float32), jnp.asarray(m_lin, jnp.float32)


# ---------------------------------------------------------------------------
# Pallas kernel (hot path: gating + symmetric contraction + o3.Linear + sc).
# ---------------------------------------------------------------------------
def kernel(xm_ref, y_ref, sc_ref, v_ref, m_ref, out_ref):
    bn = out_ref.shape[1]

    # 1) element gating for every level / target / channel: ONE MXU dot / step.
    g = jnp.dot(v_ref[...], y_ref[...],
                preferred_element_type=jnp.float32)            # (R_ALL, bn)

    # 2) hoisted, 8-aligned x multipliers: one (P, bn) pattern per ell index i,
    #    tiled once to the tallest slab (no per-multiply sublane broadcasts).
    xm = xm_ref[...]                                           # (ELL*P, bn)
    xms = []
    for i in range(ELL):
        pat = xm[i * P:(i + 1) * P, :]                         # (P, bn)
        xms.append(jnp.concatenate([pat] * TILE_REPS, axis=0))  # (TILE_REPS*P, bn)

    def contract(ct, q):
        # out[:q] = sum_i ct[i*q:(i+1)*q] * x[channel(row), i]  (8-aligned slabs)
        acc = ct[0:q, :] * xms[0][0:q, :]
        for i in range(1, ELL):
            acc = acc + ct[i * q:(i + 1) * q, :] * xms[i][0:q, :]
        return acc

    # 3) correlation chain; all channels and both target irreps are packed
    #    along the sublane axis (16-row base blocks).
    off = LEVEL_OFF[CORRELATION - 1]
    rows = LEVEL_ROWS[CORRELATION - 1]
    cur = contract(g[off:off + rows, :], rows // ELL)          # top level (no carry)
    for nu in range(CORRELATION - 1, 0, -1):
        off = LEVEL_OFF[nu - 1]
        rows = LEVEL_ROWS[nu - 1]
        cur = contract(g[off:off + rows, :] + cur, rows // ELL)
    # cur: (P, bn) packed symmetric-contraction output

    # 4) o3.Linear + packed->output reorder as one small MXU dot, residual add
    #    fused into the single lane-dense (D_TOTAL, bn) store.
    out_ref[...] = (jnp.dot(m_ref[...], cur, preferred_element_type=jnp.float32)
                    + sc_ref[...])


@jax.jit
def equivariant_product_basis_block(node_feats, node_attrs, sc, v_all, m_lin):
    n = node_feats.shape[0]
    assert n % BN == 0, "demo wrapper assumes N divisible by BN"

    # nodes -> lanes (last axis), lane-dense HBM layouts.
    # TODO(synk): at production N, produce these node-on-lane layouts upstream
    # instead of transposing in the hot path.
    xt = jnp.transpose(node_feats, (2, 1, 0))                            # (ELL, C, N)
    xm = jnp.broadcast_to(xt[:, :, None, :],
                          (ELL, C, DSUM, n)).reshape(ELL * P, n)         # (ELL*P, N)
    y_t = jnp.transpose(node_attrs, (1, 0))                              # (E, N)
    sc_t = jnp.transpose(sc, (1, 0))                                     # (D_TOTAL, N)

    out_t = pl.pallas_call(
        kernel,
        out_shape=jax.ShapeDtypeStruct((D_TOTAL, n), jnp.float32),
        grid=(n // BN,),
        in_specs=[
            pl.BlockSpec((ELL * P, BN), lambda i: (0, i)),               # x pattern
            pl.BlockSpec((E, BN), lambda i: (0, i)),                     # one-hot y
            pl.BlockSpec((D_TOTAL, BN), lambda i: (0, i)),               # sc residual
            pl.BlockSpec((R_ALL, E), lambda i: (0, 0)),                  # V constants
            pl.BlockSpec((D_TOTAL, P), lambda i: (0, 0)),                # linear matrix
        ],
        out_specs=pl.BlockSpec((D_TOTAL, BN), lambda i: (0, i)),
        input_output_aliases={2: 0},                                     # sc buffer -> out
        compiler_params=pltpu.CompilerParams(
            dimension_semantics=("parallel",)),
    )(xm, y_t, sc_t, v_all, m_lin)

    return jnp.transpose(out_t, (1, 0))                                  # (N, D_TOTAL)


# ---------------------------------------------------------------------------
# Pure numpy (float64) reference of the torch forward, for validation.
# ---------------------------------------------------------------------------
def reference_forward(node_feats, node_attrs, sc, params):
    x = np.asarray(node_feats, dtype=np.float64)
    y = np.asarray(node_attrs, dtype=np.float64)
    sc64 = np.asarray(sc, dtype=np.float64)

    outs = []
    for prm in params:
        Us, Ws = prm["U"], prm["W"]
        corr = len(Us)
        out = np.einsum("...ik,ekc,bci,be->bc...",
                        Us[corr - 1], Ws[corr - 1], x, y, optimize=True)
        for nu in range(corr - 1, 0, -1):
            ct = np.einsum("...k,ekc,be->bc...",
                           Us[nu - 1], Ws[nu - 1], y, optimize=True) + out
            out = np.einsum("bc...i,bci->bc...", ct, x, optimize=True)
        outs.append(out.reshape(out.shape[0], -1))
    z = np.concatenate(outs, axis=-1)

    lin_chunks = []
    off = 0
    for prm, (mul, ir) in zip(params, TARGET_IRREPS):
        d = ir.dim
        blk = z[:, off:off + mul * d].reshape(-1, mul, d)
        lin = PATH_W * np.einsum("uw,bud->bwd", prm["W_lin"], blk, optimize=True)
        lin_chunks.append(lin.reshape(-1, mul * d))
        off += mul * d
    out = np.concatenate(lin_chunks, axis=-1)
    if USE_SC:
        out = out + sc64
    return out


if __name__ == "__main__":
    key = jax.random.PRNGKey(0)
    key, kp, kx, ka, ks = jax.random.split(key, 5)

    params = init_params(kp)
    v_all, m_lin = build_kernel_constants(params)

    node_feats = jax.random.normal(kx, (N, C, ELL), jnp.float32)   # (nodes, channels, ell)
    species = jax.random.randint(ka, (N,), 0, E)
    node_attrs = jax.nn.one_hot(species, E, dtype=jnp.float32)     # (nodes, num_elements)
    sc = jax.random.normal(ks, (N, D_TOTAL), jnp.float32)          # residual

    out = equivariant_product_basis_block(node_feats, node_attrs, sc, v_all, m_lin)
    out = jax.block_until_ready(out)

    ref = reference_forward(node_feats, node_attrs, sc, params)
    np.testing.assert_allclose(np.asarray(out), ref, rtol=5e-3, atol=1e-3)
    print("KERNEL_OK")
</pallas_src>

<mosaic_0001>
module attributes {stable_mosaic.version = 11 : i64} {
  func.func @kernel(%arg0: i32, %arg1: memref<64x256xf32, #tpu.memory_space<vmem>>, %arg2: memref<3x256xf32, #tpu.memory_space<vmem>>, %arg3: memref<16x256xf32, #tpu.memory_space<vmem>>, %arg4: memref<1344x3xf32, #tpu.memory_space<vmem>>, %arg5: memref<16x16xf32, #tpu.memory_space<vmem>>, %arg6: memref<16x256xf32, #tpu.memory_space<vmem>>) attributes {dimension_semantics = [#tpu.dimension_semantics<parallel>], iteration_bounds = array<i64: 2>, scalar_prefetch = 0 : i64, scratch_operands = 0 : i64, tpu.core_type = #tpu.core_type<tc>, window_params = [{transform_indices = @transform_0, window_bounds = array<i64: 64, 256>}, {transform_indices = @transform_1, window_bounds = array<i64: 3, 256>}, {transform_indices = @transform_2, window_bounds = array<i64: 16, 256>}, {pipeline_mode = #tpu.pipeline_mode<synchronous>, transform_indices = @transform_3, window_bounds = array<i64: 1344, 3>}, {pipeline_mode = #tpu.pipeline_mode<synchronous>, transform_indices = @transform_4, window_bounds = array<i64: 16, 16>}, {transform_indices = @transform_5, window_bounds = array<i64: 16, 256>}]} {
    %c0 = arith.constant 0 : index
    %c0_0 = arith.constant 0 : index
    %0 = vector.load %arg4[%c0, %c0_0] : memref<1344x3xf32, #tpu.memory_space<vmem>>, vector<1344x3xf32>
    %c0_1 = arith.constant 0 : index
    %c0_2 = arith.constant 0 : index
    %1 = vector.load %arg2[%c0_1, %c0_2] : memref<3x256xf32, #tpu.memory_space<vmem>>, vector<3x256xf32>
    %cst = arith.constant dense<0.000000e+00> : vector<1344x256xf32>
    %2 = tpu.matmul %0, %1, %cst {dimension_numbers = #tpu.dot_dimension_numbers<[1], [0], [0], [1], [0, 0, 1, 1], [], []>} : vector<1344x3xf32>, vector<3x256xf32>, vector<1344x256xf32> -> vector<1344x256xf32>
    %c0_3 = arith.constant 0 : index
    %c0_4 = arith.constant 0 : index
    %3 = vector.load %arg1[%c0_3, %c0_4] : memref<64x256xf32, #tpu.memory_space<vmem>>, vector<64x256xf32>
    %4 = vector.extract_strided_slice %3 {offsets = [0, 0], sizes = [16, 256], strides = [1, 1]} : vector<64x256xf32> to vector<16x256xf32>
    %5 = tpu.concatenate %4, %4, %4, %4, %4, %4, %4, %4, %4, %4, %4, %4, %4, %4, %4, %4 in 0 : vector<16x256xf32>, vector<16x256xf32>, vector<16x256xf32>, vector<16x256xf32>, vector<16x256xf32>, vector<16x256xf32>, vector<16x256xf32>, vector<16x256xf32>, vector<16x256xf32>, vector<16x256xf32>, vector<16x256xf32>, vector<16x256xf32>, vector<16x256xf32>, vector<16x256xf32>, vector<16x256xf32>, vector<16x256xf32> -> vector<256x256xf32>
    %6 = vector.extract_strided_slice %3 {offsets = [16, 0], sizes = [16, 256], strides = [1, 1]} : vector<64x256xf32> to vector<16x256xf32>
    %7 = tpu.concatenate %6, %6, %6, %6, %6, %6, %6, %6, %6, %6, %6, %6, %6, %6, %6, %6 in 0 : vector<16x256xf32>, vector<16x256xf32>, vector<16x256xf32>, vector<16x256xf32>, vector<16x256xf32>, vector<16x256xf32>, vector<16x256xf32>, vector<16x256xf32>, vector<16x256xf32>, vector<16x256xf32>, vector<16x256xf32>, vector<16x256xf32>, vector<16x256xf32>, vector<16x256xf32>, vector<16x256xf32>, vector<16x256xf32> -> vector<256x256xf32>
    %8 = vector.extract_strided_slice %3 {offsets = [32, 0], sizes = [16, 256], strides = [1, 1]} : vector<64x256xf32> to vector<16x256xf32>
    %9 = tpu.concatenate %8, %8, %8, %8, %8, %8, %8, %8, %8, %8, %8, %8, %8, %8, %8, %8 in 0 : vector<16x256xf32>, vector<16x256xf32>, vector<16x256xf32>, vector<16x256xf32>, vector<16x256xf32>, vector<16x256xf32>, vector<16x256xf32>, vector<16x256xf32>, vector<16x256xf32>, vector<16x256xf32>, vector<16x256xf32>, vector<16x256xf32>, vector<16x256xf32>, vector<16x256xf32>, vector<16x256xf32>, vector<16x256xf32> -> vector<256x256xf32>
    %10 = vector.extract_strided_slice %3 {offsets = [48, 0], sizes = [16, 256], strides = [1, 1]} : vector<64x256xf32> to vector<16x256xf32>
    %11 = tpu.concatenate %10, %10, %10, %10, %10, %10, %10, %10, %10, %10, %10, %10, %10, %10, %10, %10 in 0 : vector<16x256xf32>, vector<16x256xf32>, vector<16x256xf32>, vector<16x256xf32>, vector<16x256xf32>, vector<16x256xf32>, vector<16x256xf32>, vector<16x256xf32>, vector<16x256xf32>, vector<16x256xf32>, vector<16x256xf32>, vector<16x256xf32>, vector<16x256xf32>, vector<16x256xf32>, vector<16x256xf32>, vector<16x256xf32> -> vector<256x256xf32>
    %12 = vector.extract_strided_slice %2 {offsets = [320, 0], sizes = [1024, 256], strides = [1, 1]} : vector<1344x256xf32> to vector<1024x256xf32>
    %13 = vector.extract_strided_slice %12 {offsets = [0, 0], sizes = [256, 256], strides = [1, 1]} : vector<1024x256xf32> to vector<256x256xf32>
    %14 = arith.mulf %13, %5 : vector<256x256xf32>
    %15 = vector.extract_strided_slice %12 {offsets = [256, 0], sizes = [256, 256], strides = [1, 1]} : vector<1024x256xf32> to vector<256x256xf32>
    %16 = arith.mulf %15, %7 : vector<256x256xf32>
    %17 = arith.addf %14, %16 : vector<256x256xf32>
    %18 = vector.extract_strided_slice %12 {offsets = [512, 0], sizes = [256, 256], strides = [1, 1]} : vector<1024x256xf32> to vector<256x256xf32>
    %19 = arith.mulf %18, %9 : vector<256x256xf32>
    %20 = arith.addf %17, %19 : vector<256x256xf32>
    %21 = vector.extract_strided_slice %12 {offsets = [768, 0], sizes = [256, 256], strides = [1, 1]} : vector<1024x256xf32> to vector<256x256xf32>
    %22 = arith.mulf %21, %11 : vector<256x256xf32>
    %23 = arith.addf %20, %22 : vector<256x256xf32>
    %24 = vector.extract_strided_slice %2 {offsets = [64, 0], sizes = [256, 256], strides = [1, 1]} : vector<1344x256xf32> to vector<256x256xf32>
    %25 = arith.addf %24, %23 : vector<256x256xf32>
    %26 = vector.extract_strided_slice %25 {offsets = [0, 0], sizes = [64, 256], strides = [1, 1]} : vector<256x256xf32> to vector<64x256xf32>
    %27 = vector.extract_strided_slice %5 {offsets = [0, 0], sizes = [64, 256], strides = [1, 1]} : vector<256x256xf32> to vector<64x256xf32>
    %28 = arith.mulf %26, %27 : vector<64x256xf32>
    %29 = vector.extract_strided_slice %25 {offsets = [64, 0], sizes = [64, 256], strides = [1, 1]} : vector<256x256xf32> to vector<64x256xf32>
    %30 = vector.extract_strided_slice %7 {offsets = [0, 0], sizes = [64, 256], strides = [1, 1]} : vector<256x256xf32> to vector<64x256xf32>
    %31 = arith.mulf %29, %30 : vector<64x256xf32>
    %32 = arith.addf %28, %31 : vector<64x256xf32>
    %33 = vector.extract_strided_slice %25 {offsets = [128, 0], sizes = [64, 256], strides = [1, 1]} : vector<256x256xf32> to vector<64x256xf32>
    %34 = vector.extract_strided_slice %9 {offsets = [0, 0], sizes = [64, 256], strides = [1, 1]} : vector<256x256xf32> to vector<64x256xf32>
    %35 = arith.mulf %33, %34 : vector<64x256xf32>
    %36 = arith.addf %32, %35 : vector<64x256xf32>
    %37 = vector.extract_strided_slice %25 {offsets = [192, 0], sizes = [64, 256], strides = [1, 1]} : vector<256x256xf32> to vector<64x256xf32>
    %38 = vector.extract_strided_slice %11 {offsets = [0, 0], sizes = [64, 256], strides = [1, 1]} : vector<256x256xf32> to vector<64x256xf32>
    %39 = arith.mulf %37, %38 : vector<64x256xf32>
    %40 = arith.addf %36, %39 : vector<64x256xf32>
    %41 = vector.extract_strided_slice %2 {offsets = [0, 0], sizes = [64, 256], strides = [1, 1]} : vector<1344x256xf32> to vector<64x256xf32>
    %42 = arith.addf %41, %40 : vector<64x256xf32>
    %43 = vector.extract_strided_slice %42 {offsets = [0, 0], sizes = [16, 256], strides = [1, 1]} : vector<64x256xf32> to vector<16x256xf32>
    %44 = vector.extract_strided_slice %5 {offsets = [0, 0], sizes = [16, 256], strides = [1, 1]} : vector<256x256xf32> to vector<16x256xf32>
    %45 = arith.mulf %43, %44 : vector<16x256xf32>
    %46 = vector.extract_strided_slice %42 {offsets = [16, 0], sizes = [16, 256], strides = [1, 1]} : vector<64x256xf32> to vector<16x256xf32>
    %47 = vector.extract_strided_slice %7 {offsets = [0, 0], sizes = [16, 256], strides = [1, 1]} : vector<256x256xf32> to vector<16x256xf32>
    %48 = arith.mulf %46, %47 : vector<16x256xf32>
    %49 = arith.addf %45, %48 : vector<16x256xf32>
    %50 = vector.extract_strided_slice %42 {offsets = [32, 0], sizes = [16, 256], strides = [1, 1]} : vector<64x256xf32> to vector<16x256xf32>
    %51 = vector.extract_strided_slice %9 {offsets = [0, 0], sizes = [16, 256], strides = [1, 1]} : vector<256x256xf32> to vector<16x256xf32>
    %52 = arith.mulf %50, %51 : vector<16x256xf32>
    %53 = arith.addf %49, %52 : vector<16x256xf32>
    %54 = vector.extract_strided_slice %42 {offsets = [48, 0], sizes = [16, 256], strides = [1, 1]} : vector<64x256xf32> to vector<16x256xf32>
    %55 = vector.extract_strided_slice %11 {offsets = [0, 0], sizes = [16, 256], strides = [1, 1]} : vector<256x256xf32> to vector<16x256xf32>
    %56 = arith.mulf %54, %55 : vector<16x256xf32>
    %57 = arith.addf %53, %56 : vector<16x256xf32>
    %c0_5 = arith.constant 0 : index
    %c0_6 = arith.constant 0 : index
    %58 = vector.load %arg5[%c0_5, %c0_6] : memref<16x16xf32, #tpu.memory_space<vmem>>, vector<16x16xf32>
    %cst_7 = arith.constant dense<0.000000e+00> : vector<16x256xf32>
    %59 = tpu.matmul %58, %57, %cst_7 {dimension_numbers = #tpu.dot_dimension_numbers<[1], [0], [0], [1], [0, 0, 1, 1], [], []>} : vector<16x16xf32>, vector<16x256xf32>, vector<16x256xf32> -> vector<16x256xf32>
    %c0_8 = arith.constant 0 : index
    %c0_9 = arith.constant 0 : index
    %60 = vector.load %arg3[%c0_8, %c0_9] : memref<16x256xf32, #tpu.memory_space<vmem>>, vector<16x256xf32>
    %61 = arith.addf %59, %60 : vector<16x256xf32>
    %c0_10 = arith.constant 0 : index
    %c0_11 = arith.constant 0 : index
    %62 = vector.load %arg6[%c0_10, %c0_11] : memref<16x256xf32, #tpu.memory_space<vmem>>, vector<16x256xf32>
    tpu.vector_store %arg6[%c0_10, %c0_11], %61 {strides = array<i32>} : memref<16x256xf32, #tpu.memory_space<vmem>>, vector<16x256xf32>,
    return
  }
  func.func @transform_0(%arg0: i32) -> (i32, i32) {
    %c0_i32 = arith.constant 0 : i32
    %c0_i32_0 = arith.constant 0 : i32
    return %c0_i32, %arg0 : i32, i32
  }
  func.func @transform_1(%arg0: i32) -> (i32, i32) {
    %c0_i32 = arith.constant 0 : i32
    %c0_i32_0 = arith.constant 0 : i32
    return %c0_i32, %arg0 : i32, i32
  }
  func.func @transform_2(%arg0: i32) -> (i32, i32) {
    %c0_i32 = arith.constant 0 : i32
    %c0_i32_0 = arith.constant 0 : i32
    return %c0_i32, %arg0 : i32, i32
  }
  func.func @transform_3(%arg0: i32) -> (i32, i32) {
    %c0_i32 = arith.constant 0 : i32
    %c0_i32_0 = arith.constant 0 : i32
    %c0_i32_1 = arith.constant 0 : i32
    return %c0_i32, %c0_i32_0 : i32, i32
  }
  func.func @transform_4(%arg0: i32) -> (i32, i32) {
    %c0_i32 = arith.constant 0 : i32
    %c0_i32_0 = arith.constant 0 : i32
    %c0_i32_1 = arith.constant 0 : i32
    return %c0_i32, %c0_i32_0 : i32, i32
  }
  func.func @transform_5(%arg0: i32) -> (i32, i32) {
    %c0_i32 = arith.constant 0 : i32
    %c0_i32_0 = arith.constant 0 : i32
    return %c0_i32, %arg0 : i32, i32
  }
}

</mosaic_0001>

<llo_original>
// kernel: equivariant_product_basis_block.1
$region0: #{equivariant_product_basis_block.1}
  #allocation0 [shape = 'u32[]', space=smem, size = 0x4, offset = 0x4, fixed_abs, tag = 'smem constant byte address 0x4 - core index']
  #allocation1 [shape = 'u32[144,128]{1,0:T(1,128)}', space=vmem, size = 0x12000, scoped, tag = 'internal scratch']
  %s0 = inlined_call_operand.vmem [shape: f32[64,512], index: 0, kind: input, shape index: {}]
  %s1 = inlined_call_operand.vmem [shape: f32[3,512], index: 1, kind: input, shape index: {}]
  %s2 = inlined_call_operand.vmem [shape: f32[16,512], index: 2, kind: input, shape index: {}, may-alias: {2,5}]
  %s3 = inlined_call_operand.vmem [shape: f32[1344,3], index: 3, kind: input, shape index: {}]
  %s4 = inlined_call_operand.vmem [shape: f32[16,16], index: 4, kind: input, shape index: {}]
  %s5 = inlined_call_operand.vmem [shape: f32[16,512], index: 5, kind: output, shape index: {}, may-alias: {2,5}]
  %s6 = sld [smem:[#allocation0]]
  $region118: #{equivariant_product_basis_block.1} parent=0
    _
  %s8 = ssub.s32 1, %s6
  %s9 = scalar_select 0, %s8, %s6
  $region1: #{equivariant_product_basis_block.1} parent=0
    #allocation2 [shape = 'u8[131072]{0}', space=vmem, size = 0x20000, scoped, tag = 'input window, operand 0']
    #allocation3 [shape = 'u8[32768]{0}', space=vmem, size = 0x8000, scoped, tag = 'input window, operand 2']
    #allocation4 [shape = 'u8[32768]{0}', space=vmem, size = 0x8000, scoped, tag = 'output window, operand 0']
    loop: start=0, step=1, limit=4
    $region2: #{equivariant_product_basis_block.1} parent=1 // loop_pre_header
      _
    $region3: #{equivariant_product_basis_block.1} parent=1 // loop_header
      %s11 = sphi 0, %s15
      %p12 = scmp.ge.s32.totalorder %s11, 4
      %s21 = sphi 0, %s23
      %s24 = sphi 0, %s21
      %s25 = sphi 0, %s24
      %s41 = sphi 0, %s25
      %s47 = sphi 0, %s49
      %s50 = sphi 0, %s47
      %s51 = sphi 0, %s50
      %s67 = sphi 0, %s51
      %s73 = sphi 0, %s75
      %s76 = sphi 0, %s73
      %s77 = sphi 0, %s76
      %s93 = sphi 0, %s77
      %s97 = sphi 0, %s97
      %s99 = sphi 0, %s97
      %s100 = sphi 0, %s99
      %s114 = sphi 0, %s100
      %s118 = sphi 0, %s118
      %s120 = sphi 0, %s118
      %s121 = sphi 0, %s120
      %s135 = sphi 0, %s121
      %s141 = sphi 0, %s143
      %s144 = sphi 0, %s141
      %s145 = sphi 0, %s144
      %s161 = sphi 0, %s145
    $region4: #{equivariant_product_basis_block.1} parent=1 // loop_header_branch
      %14 = sbr.rel (%p12) target = $region8
    $region5: #{equivariant_product_basis_block.1} parent=1 // loop_body
      %s16 = ssub.s32 %s11, 1
      %s17 = ssub.s32 %s11, 2
      %s18 = sadd.s32 %s11, 1
      %s19 = ssub.s32 %s11, %s18
      %p20 = scmp.eq.s32.totalorder %s19, 0
      %s22 = sadd.s32 %s21, 1
      %s23 = scalar_select %p20, %s21, %s22
      %p26 = pneg %p20
      %p27 = scmp.eq.s32.totalorder %s11, 1
      %p28 = por %p26, %p27
      %p29 = scmp.ne.s32.totalorder %s21, %s24
      %p30 = scmp.eq.s32.totalorder %s11, 0
      %p31 = por %p29, %p30
      %p32 = scmp.ne.s32.totalorder %s21, %s24
      %p33 = scmp.eq.s32.totalorder %s16, 1
      %p34 = por %p32, %p33
      %p35 = scmp.ne.s32.totalorder %s24, %s25
      %p36 = scmp.eq.s32.totalorder %s16, 0
      %p37 = por %p35, %p36
      %p38 = scmp.ne.s32.totalorder %s24, %s25
      %p39 = scmp.eq.s32.totalorder %s17, 1
      %p40 = por %p38, %p39
      %p42 = scmp.ne.s32.totalorder %s25, %s41
      %p43 = scmp.eq.s32.totalorder %s17, 0
      %p44 = por %p42, %p43
      %s45 = ssub.s32 %s11, %s18
      %p46 = scmp.eq.s32.totalorder %s45, 0
      %s48 = sadd.s32 %s47, 1
      %s49 = scalar_select %p46, %s47, %s48
      %p52 = pneg %p46
      %p53 = scmp.eq.s32.totalorder %s11, 1
      %p54 = por %p52, %p53
      %p55 = scmp.ne.s32.totalorder %s47, %s50
      %p56 = scmp.eq.s32.totalorder %s11, 0
      %p57 = por %p55, %p56
      %p58 = scmp.ne.s32.totalorder %s47, %s50
      %p59 = scmp.eq.s32.totalorder %s16, 1
      %p60 = por %p58, %p59
      %p61 = scmp.ne.s32.totalorder %s50, %s51
      %p62 = scmp.eq.s32.totalorder %s16, 0
      %p63 = por %p61, %p62
      %p64 = scmp.ne.s32.totalorder %s50, %s51
      %p65 = scmp.eq.s32.totalorder %s17, 1
      %p66 = por %p64, %p65
      %p68 = scmp.ne.s32.totalorder %s51, %s67
      %p69 = scmp.eq.s32.totalorder %s17, 0
      %p70 = por %p68, %p69
      %s71 = ssub.s32 %s11, %s18
      %p72 = scmp.eq.s32.totalorder %s71, 0
      %s74 = sadd.s32 %s73, 1
      %s75 = scalar_select %p72, %s73, %s74
      %p78 = pneg %p72
      %p79 = scmp.eq.s32.totalorder %s11, 1
      %p80 = por %p78, %p79
      %p81 = scmp.ne.s32.totalorder %s73, %s76
      %p82 = scmp.eq.s32.totalorder %s11, 0
      %p83 = por %p81, %p82
      %p84 = scmp.ne.s32.totalorder %s73, %s76
      %p85 = scmp.eq.s32.totalorder %s16, 1
      %p86 = por %p84, %p85
      %p87 = scmp.ne.s32.totalorder %s76, %s77
      %p88 = scmp.eq.s32.totalorder %s16, 0
      %p89 = por %p87, %p88
      %p90 = scmp.ne.s32.totalorder %s76, %s77
      %p91 = scmp.eq.s32.totalorder %s17, 1
      %p92 = por %p90, %p91
      %p94 = scmp.ne.s32.totalorder %s77, %s93
      %p95 = scmp.eq.s32.totalorder %s17, 0
      %p96 = por %p94, %p95
      %s98 = sadd.s32 %s97, 1
      %p101 = scmp.eq.s32.totalorder %s11, 1
      %p102 = scmp.ne.s32.totalorder %s97, %s99
      %p103 = scmp.eq.s32.totalorder %s11, 0
      %p104 = por %p102, %p103
      %p105 = scmp.ne.s32.totalorder %s97, %s99
      %p106 = scmp.eq.s32.totalorder %s16, 1
      %p107 = por %p105, %p106
      %p108 = scmp.ne.s32.totalorder %s99, %s100
      %p109 = scmp.eq.s32.totalorder %s16, 0
      %p110 = por %p108, %p109
      %p111 = scmp.ne.s32.totalorder %s99, %s100
      %p112 = scmp.eq.s32.totalorder %s17, 1
      %p113 = por %p111, %p112
      %p115 = scmp.ne.s32.totalorder %s100, %s114
      %p116 = scmp.eq.s32.totalorder %s17, 0
      %p117 = por %p115, %p116
      %s119 = sadd.s32 %s118, 1
      %p122 = scmp.eq.s32.totalorder %s11, 1
      %p123 = scmp.ne.s32.totalorder %s118, %s120
      %p124 = scmp.eq.s32.totalorder %s11, 0
      %p125 = por %p123, %p124
      %p126 = scmp.ne.s32.totalorder %s118, %s120
      %p127 = scmp.eq.s32.totalorder %s16, 1
      %p128 = por %p126, %p127
      %p129 = scmp.ne.s32.totalorder %s120, %s121
      %p130 = scmp.eq.s32.totalorder %s16, 0
      %p131 = por %p129, %p130
      %p132 = scmp.ne.s32.totalorder %s120, %s121
      %p133 = scmp.eq.s32.totalorder %s17, 1
      %p134 = por %p132, %p133
      %p136 = scmp.ne.s32.totalorder %s121, %s135
      %p137 = scmp.eq.s32.totalorder %s17, 0
      %p138 = por %p136, %p137
      %s139 = ssub.s32 %s11, %s18
      %p140 = scmp.eq.s32.totalorder %s139, 0
      %s142 = sadd.s32 %s141, 1
      %s143 = scalar_select %p140, %s141, %s142
      %p146 = pneg %p140
      %p147 = scmp.eq.s32.totalorder %s11, 1
      %p148 = por %p146, %p147
      %p149 = scmp.ne.s32.totalorder %s141, %s144
      %p150 = scmp.eq.s32.totalorder %s11, 0
      %p151 = por %p149, %p150
      %p152 = scmp.ne.s32.totalorder %s141, %s144
      %p153 = scmp.eq.s32.totalorder %s16, 1
      %p154 = por %p152, %p153
      %p155 = scmp.ne.s32.totalorder %s144, %s145
      %p156 = scmp.eq.s32.totalorder %s16, 0
      %p157 = por %p155, %p156
      %p158 = scmp.ne.s32.totalorder %s144, %s145
      %p159 = scmp.eq.s32.totalorder %s17, 1
      %p160 = por %p158, %p159
      %p162 = scmp.ne.s32.totalorder %s145, %s161
      %p163 = scmp.eq.s32.totalorder %s17, 0
      %p164 = por %p162, %p163
      %p165 = scmp.le.s32.totalorder 1, %s11
      %p166 = scmp.lt.s32.totalorder %s11, 3
      %p167 = pnand %p165, %p166
      %p168 = pneg %p167
      // Predicated region
      $region9: #{equivariant_product_basis_block.1} parent=5 // pred_check
        _
      $region10: #{equivariant_product_basis_block.1} parent=5 // pred_check_branch
        %170 = sbr.rel (%p167) target = $region12
      $region11: #{equivariant_product_basis_block.1} parent=5 // pred_region
        %s171 = ssub.s32 %s11, 1
        // Predicated region
        $region13: #{equivariant_product_basis_block.1} parent=11 // pred_check
          %p172 = pneg %p110
        $region14: #{equivariant_product_basis_block.1} parent=11 // pred_check_branch
          %174 = sbr.rel (%p172) target = $region16
        $region15: #{equivariant_product_basis_block.1} parent=11 // pred_region
          _
        $region16: #{equivariant_product_basis_block.1} parent=11 // pred_fallthru
          _
        // Predicated region
        $region17: #{equivariant_product_basis_block.1} parent=11 // pred_check
          %p175 = pneg %p131
        $region18: #{equivariant_product_basis_block.1} parent=11 // pred_check_branch
          %177 = sbr.rel (%p175) target = $region20
        $region19: #{equivariant_product_basis_block.1} parent=11 // pred_region
          _
        $region20: #{equivariant_product_basis_block.1} parent=11 // pred_fallthru
          _
      $region12: #{equivariant_product_basis_block.1} parent=5 // pred_fallthru
        _
      %p178 = scmp.lt.s32.totalorder %s11, 2
      // Predicated region
      $region21: #{equivariant_product_basis_block.1} parent=5 // pred_check
        %p179 = pneg %p178
      $region22: #{equivariant_product_basis_block.1} parent=5 // pred_check_branch
        %181 = sbr.rel (%p179) target = $region24
      $region23: #{equivariant_product_basis_block.1} parent=5 // pred_region
        // Predicated region
        $region25: #{equivariant_product_basis_block.1} parent=23 // pred_check
          %p182 = pneg %p31
        $region26: #{equivariant_product_basis_block.1} parent=23 // pred_check_branch
          %184 = sbr.rel (%p182) target = $region28
        $region27: #{equivariant_product_basis_block.1} parent=23 // pred_region
          %s185 = sand.u32 %s21, 1
          %s186 = sand.u32 %s21, 1
          %s187 = smul.addr %s186, 128
          %s188 = scalar_lea.vmem [#allocation2], %s187
          %s189 = smul.u32 2, %s11
          %s190 = smul.addr %s189, 8
          %s191 = scalar_lea.vmem %s0, %s190
          // Predicated region
          $region29: #{equivariant_product_basis_block.1} parent=27 // pred_check
            _
          $region30: #{equivariant_product_basis_block.1} parent=27 // pred_check_branch
            %193 = sbr.rel (0) target = $region32
          $region31: #{equivariant_product_basis_block.1} parent=27 // pred_region
            // Predicated region
            $region33: #{equivariant_product_basis_block.1} parent=31 // pred_check
              _
            $region34: #{equivariant_product_basis_block.1} parent=31 // pred_check_branch
              %195 = sbr.rel (0) target = $region36
            $region35: #{equivariant_product_basis_block.1} parent=31 // pred_region
              loop: start=0, step=1, limit=1
              $region37: #{equivariant_product_basis_block.1} parent=35 // loop_pre_header
                _
              $region38: #{equivariant_product_basis_block.1} parent=35 // loop_header
                %s197 = sphi 0, %s201
                %p198 = scmp.ge.s32.totalorder %s197, 1
                %s202 = sphi %s191, %s191
                %s203 = sphi %s188, %s188
              $region39: #{equivariant_product_basis_block.1} parent=35 // loop_header_branch
                %200 = sbr.rel (%p198) target = $region43
              $region40: #{equivariant_product_basis_block.1} parent=35 // loop_body
                %v204 = vld [vmem:[%s202] sm:$0xff]
                %205 = vst [vmem:[%s203] sm:$0xff] %v204
                %v206 = vld [vmem:[%s202 + $0x8] sm:$0xff]
                %207 = vst [vmem:[%s203 + $0x8] sm:$0xff] %v206
                %v208 = vld [vmem:[%s202 + $0x20] sm:$0xff]
                %209 = vst [vmem:[%s203 + $0x10] sm:$0xff] %v208
                %v210 = vld [vmem:[%s202 + $0x28] sm:$0xff]
                %211 = vst [vmem:[%s203 + $0x18] sm:$0xff] %v210
                %v212 = vld [vmem:[%s202 + $0x40] sm:$0xff]
                %213 = vst [vmem:[%s203 + $0x20] sm:$0xff] %v212
                %v214 = vld [vmem:[%s202 + $0x48] sm:$0xff]
                %215 = vst [vmem:[%s203 + $0x28] sm:$0xff] %v214
                %v216 = vld [vmem:[%s202 + $0x60] sm:$0xff]
                %217 = vst [vmem:[%s203 + $0x30] sm:$0xff] %v216
                %v218 = vld [vmem:[%s202 + $0x68] sm:$0xff]
                %219 = vst [vmem:[%s203 + $0x38] sm:$0xff] %v218
                %v220 = vld [vmem:[%s202 + $0x80] sm:$0xff]
                %221 = vst [vmem:[%s203 + $0x40] sm:$0xff] %v220
                %v222 = vld [vmem:[%s202 + $0x88] sm:$0xff]
                %223 = vst [vmem:[%s203 + $0x48] sm:$0xff] %v222
                %v224 = vld [vmem:[%s202 + $0xa0] sm:$0xff]
                %225 = vst [vmem:[%s203 + $0x50] sm:$0xff] %v224
                %v226 = vld [vmem:[%s202 + $0xa8] sm:$0xff]
                %227 = vst [vmem:[%s203 + $0x58] sm:$0xff] %v226
                %v228 = vld [vmem:[%s202 + $0xc0] sm:$0xff]
                %229 = vst [vmem:[%s203 + $0x60] sm:$0xff] %v228
                %v230 = vld [vmem:[%s202 + $0xc8] sm:$0xff]
                %231 = vst [vmem:[%s203 + $0x68] sm:$0xff] %v230
                %v232 = vld [vmem:[%s202 + $0xe0] sm:$0xff]
                %233 = vst [vmem:[%s203 + $0x70] sm:$0xff] %v232
                %v234 = vld [vmem:[%s202 + $0xe8] sm:$0xff]
                %235 = vst [vmem:[%s203 + $0x78] sm:$0xff] %v234
              $region41: #{equivariant_product_basis_block.1} parent=35 // loop_footer
                %s201 = sadd.s32 1, %s197
              $region42: #{equivariant_product_basis_block.1} parent=35 // loop_footer_branch
                %196 = sbr.rel target = $region38
              $region43: #{equivariant_product_basis_block.1} parent=35 // loop_exit
                _
            $region36: #{equivariant_product_basis_block.1} parent=31 // pred_fallthru
              _
            // Predicated region
            $region44: #{equivariant_product_basis_block.1} parent=31 // pred_check
              _
            $region45: #{equivariant_product_basis_block.1} parent=31 // pred_check_branch
              %237 = sbr.rel target = $region47
            $region46: #{equivariant_product_basis_block.1} parent=31 // pred_region
              _
            $region47: #{equivariant_product_basis_block.1} parent=31 // pred_fallthru
              _
          $region32: #{equivariant_product_basis_block.1} parent=27 // pred_fallthru
            _
          %238 = vnop
        $region28: #{equivariant_product_basis_block.1} parent=23 // pred_fallthru
          _
        // Predicated region
        $region48: #{equivariant_product_basis_block.1} parent=23 // pred_check
          %p239 = pneg %p57
        $region49: #{equivariant_product_basis_block.1} parent=23 // pred_check_branch
          %241 = sbr.rel (%p239) target = $region51
        $region50: #{equivariant_product_basis_block.1} parent=23 // pred_region
          %s242 = smul.u32 2, %s11
          %p243 = scmp.lt.s32.totalorder %s242, 3
          %s244 = scalar_select %p243, %s242, 3
          %s245 = smul.addr %s244, 4
          %s246 = scalar_lea.vmem %s1, %s245
          %s247 = smul.u32 2, %s11
        $region51: #{equivariant_product_basis_block.1} parent=23 // pred_fallthru
          _
        // Predicated region
        $region52: #{equivariant_product_basis_block.1} parent=23 // pred_check
          %p248 = pneg %p83
        $region53: #{equivariant_product_basis_block.1} parent=23 // pred_check_branch
          %250 = sbr.rel (%p248) target = $region55
        $region54: #{equivariant_product_basis_block.1} parent=23 // pred_region
          %s251 = sand.u32 %s73, 1
          %s252 = sand.u32 %s73, 1
          %s253 = smul.addr %s252, 32
          %s254 = scalar_lea.vmem [#allocation3], %s253
          %s255 = smul.u32 2, %s11
          %s256 = smul.addr %s255, 8
          %s257 = scalar_lea.vmem %s2, %s256
          // Predicated region
          $region56: #{equivariant_product_basis_block.1} parent=54 // pred_check
            _
          $region57: #{equivariant_product_basis_block.1} parent=54 // pred_check_branch
            %259 = sbr.rel (0) target = $region59
          $region58: #{equivariant_product_basis_block.1} parent=54 // pred_region
            // Predicated region
            $region60: #{equivariant_product_basis_block.1} parent=58 // pred_check
              _
            $region61: #{equivariant_product_basis_block.1} parent=58 // pred_check_branch
              %261 = sbr.rel (0) target = $region63
            $region62: #{equivariant_product_basis_block.1} parent=58 // pred_region
              loop: start=0, step=1, limit=1
              $region64: #{equivariant_product_basis_block.1} parent=62 // loop_pre_header
                _
              $region65: #{equivariant_product_basis_block.1} parent=62 // loop_header
                %s263 = sphi 0, %s267
                %p264 = scmp.ge.s32.totalorder %s263, 1
                %s268 = sphi %s257, %s257
                %s269 = sphi %s254, %s254
              $region66: #{equivariant_product_basis_block.1} parent=62 // loop_header_branch
                %266 = sbr.rel (%p264) target = $region70
              $region67: #{equivariant_product_basis_block.1} parent=62 // loop_body
                %v270 = vld [vmem:[%s268] sm:$0xff]
                %271 = vst [vmem:[%s269] sm:$0xff] %v270
                %v272 = vld [vmem:[%s268 + $0x8] sm:$0xff]
                %273 = vst [vmem:[%s269 + $0x8] sm:$0xff] %v272
                %v274 = vld [vmem:[%s268 + $0x20] sm:$0xff]
                %275 = vst [vmem:[%s269 + $0x10] sm:$0xff] %v274
                %v276 = vld [vmem:[%s268 + $0x28] sm:$0xff]
                %277 = vst [vmem:[%s269 + $0x18] sm:$0xff] %v276
              $region68: #{equivariant_product_basis_block.1} parent=62 // loop_footer
                %s267 = sadd.s32 1, %s263
              $region69: #{equivariant_product_basis_block.1} parent=62 // loop_footer_branch
                %262 = sbr.rel target = $region65
              $region70: #{equivariant_product_basis_block.1} parent=62 // loop_exit
                _
            $region63: #{equivariant_product_basis_block.1} parent=58 // pred_fallthru
              _
            // Predicated region
            $region71: #{equivariant_product_basis_block.1} parent=58 // pred_check
              _
            $region72: #{equivariant_product_basis_block.1} parent=58 // pred_check_branch
              %279 = sbr.rel target = $region74
            $region73: #{equivariant_product_basis_block.1} parent=58 // pred_region
              _
            $region74: #{equivariant_product_basis_block.1} parent=58 // pred_fallthru
              _
          $region59: #{equivariant_product_basis_block.1} parent=54 // pred_fallthru
            _
          %280 = vnop
        $region55: #{equivariant_product_basis_block.1} parent=23 // pred_fallthru
          _
      $region24: #{equivariant_product_basis_block.1} parent=5 // pred_fallthru
        _
      %p281 = scmp.le.s32.totalorder 1, %s11
      %p282 = scmp.lt.s32.totalorder %s11, 3
      %p283 = pnand %p281, %p282
      %p284 = pneg %p283
      // Predicated region
      $region75: #{equivariant_product_basis_block.1} parent=5 // pred_check
        _
      $region76: #{equivariant_product_basis_block.1} parent=5 // pred_check_branch
        %286 = sbr.rel (%p283) target = $region78
      $region77: #{equivariant_product_basis_block.1} parent=5 // pred_region
        %s287 = ssub.s32 %s11, 1
        %s288 = sand.u32 %s24, 1
        %s289 = sand.u32 %s24, 1
        %s290 = smul.addr %s289, 128
        %s291 = scalar_lea.vmem [#allocation2], %s290
        // Predicated region
        $region79: #{equivariant_product_basis_block.1} parent=77 // pred_check
          %p292 = pneg %p37
        $region80: #{equivariant_product_basis_block.1} parent=77 // pred_check_branch
          %294 = sbr.rel (%p292) target = $region82
        $region81: #{equivariant_product_basis_block.1} parent=77 // pred_region
          _
        $region82: #{equivariant_product_basis_block.1} parent=77 // pred_fallthru
          _
        %s295 = sand.u32 %s76, 1
        %s296 = sand.u32 %s76, 1
        %s297 = smul.addr %s296, 32
        %s298 = scalar_lea.vmem [#allocation3], %s297
        // Predicated region
        $region83: #{equivariant_product_basis_block.1} parent=77 // pred_check
          %p299 = pneg %p89
        $region84: #{equivariant_product_basis_block.1} parent=77 // pred_check_branch
          %301 = sbr.rel (%p299) target = $region86
        $region85: #{equivariant_product_basis_block.1} parent=77 // pred_region
          _
        $region86: #{equivariant_product_basis_block.1} parent=77 // pred_fallthru
          _
        %s302 = sand.u32 %s24, 1
        %s303 = sand.u32 %s24, 1
        %s304 = smul.addr %s303, 128
        %s305 = scalar_lea.vmem [#allocation2], %s304
        %p306 = pneg %p37
        %p307 = pneg %p34
        %s308 = smul.u32 2, %s16
        %p309 = scmp.lt.s32.totalorder %s308, 3
        %s310 = scalar_select %p309, %s308, 3
        %s311 = smul.addr %s310, 4
        %s312 = scalar_lea.vmem %s1, %s311
        %p313 = pneg %p63
        %p314 = pneg %p60
        %s315 = sand.u32 %s76, 1
        %s316 = sand.u32 %s76, 1
        %s317 = smul.addr %s316, 32
        %s318 = scalar_lea.vmem [#allocation3], %s317
        %p319 = pneg %p89
        %p320 = pneg %p86
        %p321 = pneg %p110
        %p322 = pneg %p107
        %p323 = pneg %p131
        %p324 = pneg %p128
        %p325 = pneg %p157
        %p326 = pneg %p154
        %s327 = sand.u32 %s144, 1
        %s328 = sand.u32 %s144, 1
        %s329 = smul.addr %s328, 32
        %s330 = scalar_lea.vmem [#allocation4], %s329
        %s331 = smul.u32 2, %s16
        %s332 = smul.u32 2, %s16
        %p333 = scmp.lt.s32.totalorder %s332, 3
        %s334 = scalar_select %p333, %s332, 3
        %s335 = smul.addr %s334, 4
        %s336 = scalar_lea.vmem %s1, %s335
        %s337 = smul.u32 2, %s16
        %s338 = smul.u32 2, %s16
        %s339 = smul.u32 2, %s16
        %v340 = vld [vmem:[%s3] sm:$0xff]
        %v341 = vld [vmem:[%s3 + $0x8] sm:$0xff]
        %v342 = vld [vmem:[%s3 + $0x10] sm:$0xff]
        %v343 = vld [vmem:[%s3 + $0x18] sm:$0xff]
        %v344 = vld [vmem:[%s3 + $0x20] sm:$0xff]
        %v345 = vld [vmem:[%s3 + $0x28] sm:$0xff]
        %v346 = vld [vmem:[%s3 + $0x30] sm:$0xff]
        %v347 = vld [vmem:[%s3 + $0x38] sm:$0xff]
        %v348 = vld [vmem:[%s3 + $0x40] sm:$0xff]
        %v349 = vld [vmem:[%s3 + $0x48] sm:$0xff]
        %v350 = vld [vmem:[%s3 + $0x50] sm:$0xff]
        %v351 = vld [vmem:[%s3 + $0x58] sm:$0xff]
        %v352 = vld [vmem:[%s3 + $0x60] sm:$0xff]
        %v353 = vld [vmem:[%s3 + $0x68] sm:$0xff]
        %v354 = vld [vmem:[%s3 + $0x70] sm:$0xff]
        %v355 = vld [vmem:[%s3 + $0x78] sm:$0xff]
        %v356 = vld [vmem:[%s3 + $0x80] sm:$0xff]
        %v357 = vld [vmem:[%s3 + $0x88] sm:$0xff]
        %v358 = vld [vmem:[%s3 + $0x90] sm:$0xff]
        %v359 = vld [vmem:[%s3 + $0x98] sm:$0xff]
        %v360 = vld [vmem:[%s3 + $0xa0] sm:$0xff]
        %v361 = vld [vmem:[%s3 + $0xa8] sm:$0xff]
        %v362 = vld [vmem:[%s3 + $0xb0] sm:$0xff]
        %v363 = vld [vmem:[%s3 + $0xb8] sm:$0xff]
        %v364 = vld [vmem:[%s3 + $0xc0] sm:$0xff]
        %v365 = vld [vmem:[%s3 + $0xc8] sm:$0xff]
        %v366 = vld [vmem:[%s3 + $0xd0] sm:$0xff]
        %v367 = vld [vmem:[%s3 + $0xd8] sm:$0xff]
        %v368 = vld [vmem:[%s3 + $0xe0] sm:$0xff]
        %v369 = vld [vmem:[%s3 + $0xe8] sm:$0xff]
        %v370 = vld [vmem:[%s3 + $0xf0] sm:$0xff]
        %v371 = vld [vmem:[%s3 + $0xf8] sm:$0xff]
        %v372 = vld [vmem:[%s3 + $0x100] sm:$0xff]
        %v373 = vld [vmem:[%s3 + $0x108] sm:$0xff]
        %v374 = vld [vmem:[%s3 + $0x110] sm:$0xff]
        %v375 = vld [vmem:[%s3 + $0x118] sm:$0xff]
        %v376 = vld [vmem:[%s3 + $0x120] sm:$0xff]
        %v377 = vld [vmem:[%s3 + $0x128] sm:$0xff]
        %v378 = vld [vmem:[%s3 + $0x130] sm:$0xff]
        %v379 = vld [vmem:[%s3 + $0x138] sm:$0xff]
        %v380 = vld [vmem:[%s3 + $0x140] sm:$0xff]
        %v381 = vld [vmem:[%s3 + $0x148] sm:$0xff]
        %v382 = vld [vmem:[%s3 + $0x150] sm:$0xff]
        %v383 = vld [vmem:[%s3 + $0x158] sm:$0xff]
        %v384 = vld [vmem:[%s3 + $0x160] sm:$0xff]
        %v385 = vld [vmem:[%s3 + $0x168] sm:$0xff]
        %v386 = vld [vmem:[%s3 + $0x170] sm:$0xff]
        %v387 = vld [vmem:[%s3 + $0x178] sm:$0xff]
        %v388 = vld [vmem:[%s3 + $0x180] sm:$0xff]
        %v389 = vld [vmem:[%s3 + $0x188] sm:$0xff]
        %v390 = vld [vmem:[%s3 + $0x190] sm:$0xff]
        %v391 = vld [vmem:[%s3 + $0x198] sm:$0xff]
        %v392 = vld [vmem:[%s3 + $0x1a0] sm:$0xff]
        %v393 = vld [vmem:[%s3 + $0x1a8] sm:$0xff]
        %v394 = vld [vmem:[%s3 + $0x1b0] sm:$0xff]
        %v395 = vld [vmem:[%s3 + $0x1b8] sm:$0xff]
        %v396 = vld [vmem:[%s3 + $0x1c0] sm:$0xff]
        %v397 = vld [vmem:[%s3 + $0x1c8] sm:$0xff]
        %v398 = vld [vmem:[%s3 + $0x1d0] sm:$0xff]
        %v399 = vld [vmem:[%s3 + $0x1d8] sm:$0xff]
        %v400 = vld [vmem:[%s3 + $0x1e0] sm:$0xff]
        %v401 = vld [vmem:[%s3 + $0x1e8] sm:$0xff]
        %v402 = vld [vmem:[%s3 + $0x1f0] sm:$0xff]
        %v403 = vld [vmem:[%s3 + $0x1f8] sm:$0xff]
        %v404 = vld [vmem:[%s3 + $0x200] sm:$0xff]
        %v405 = vld [vmem:[%s3 + $0x208] sm:$0xff]
        %v406 = vld [vmem:[%s3 + $0x210] sm:$0xff]
        %v407 = vld [vmem:[%s3 + $0x218] sm:$0xff]
        %v408 = vld [vmem:[%s3 + $0x220] sm:$0xff]
        %v409 = vld [vmem:[%s3 + $0x228] sm:$0xff]
        %v410 = vld [vmem:[%s3 + $0x230] sm:$0xff]
        %v411 = vld [vmem:[%s3 + $0x238] sm:$0xff]
        %v412 = vld [vmem:[%s3 + $0x240] sm:$0xff]
        %v413 = vld [vmem:[%s3 + $0x248] sm:$0xff]
        %v414 = vld [vmem:[%s3 + $0x250] sm:$0xff]
        %v415 = vld [vmem:[%s3 + $0x258] sm:$0xff]
        %v416 = vld [vmem:[%s3 + $0x260] sm:$0xff]
        %v417 = vld [vmem:[%s3 + $0x268] sm:$0xff]
        %v418 = vld [vmem:[%s3 + $0x270] sm:$0xff]
        %v419 = vld [vmem:[%s3 + $0x278] sm:$0xff]
        %v420 = vld [vmem:[%s3 + $0x280] sm:$0xff]
        %v421 = vld [vmem:[%s3 + $0x288] sm:$0xff]
        %v422 = vld [vmem:[%s3 + $0x290] sm:$0xff]
        %v423 = vld [vmem:[%s3 + $0x298] sm:$0xff]
        %v424 = vld [vmem:[%s3 + $0x2a0] sm:$0xff]
        %v425 = vld [vmem:[%s3 + $0x2a8] sm:$0xff]
        %v426 = vld [vmem:[%s3 + $0x2b0] sm:$0xff]
        %v427 = vld [vmem:[%s3 + $0x2b8] sm:$0xff]
        %v428 = vld [vmem:[%s3 + $0x2c0] sm:$0xff]
        %v429 = vld [vmem:[%s3 + $0x2c8] sm:$0xff]
        %v430 = vld [vmem:[%s3 + $0x2d0] sm:$0xff]
        %v431 = vld [vmem:[%s3 + $0x2d8] sm:$0xff]
        %v432 = vld [vmem:[%s3 + $0x2e0] sm:$0xff]
        %v433 = vld [vmem:[%s3 + $0x2e8] sm:$0xff]
        %v434 = vld [vmem:[%s3 + $0x2f0] sm:$0xff]
        %v435 = vld [vmem:[%s3 + $0x2f8] sm:$0xff]
        %v436 = vld [vmem:[%s3 + $0x300] sm:$0xff]
        %v437 = vld [vmem:[%s3 + $0x308] sm:$0xff]
        %v438 = vld [vmem:[%s3 + $0x310] sm:$0xff]
        %v439 = vld [vmem:[%s3 + $0x318] sm:$0xff]
        %v440 = vld [vmem:[%s3 + $0x320] sm:$0xff]
        %v441 = vld [vmem:[%s3 + $0x328] sm:$0xff]
        %v442 = vld [vmem:[%s3 + $0x330] sm:$0xff]
        %v443 = vld [vmem:[%s3 + $0x338] sm:$0xff]
        %v444 = vld [vmem:[%s3 + $0x340] sm:$0xff]
        %v445 = vld [vmem:[%s3 + $0x348] sm:$0xff]
        %v446 = vld [vmem:[%s3 + $0x350] sm:$0xff]
        %v447 = vld [vmem:[%s3 + $0x358] sm:$0xff]
        %v448 = vld [vmem:[%s3 + $0x360] sm:$0xff]
        %v449 = vld [vmem:[%s3 + $0x368] sm:$0xff]
        %v450 = vld [vmem:[%s3 + $0x370] sm:$0xff]
        %v451 = vld [vmem:[%s3 + $0x378] sm:$0xff]
        %v452 = vld [vmem:[%s3 + $0x380] sm:$0xff]
        %v453 = vld [vmem:[%s3 + $0x388] sm:$0xff]
        %v454 = vld [vmem:[%s3 + $0x390] sm:$0xff]
        %v455 = vld [vmem:[%s3 + $0x398] sm:$0xff]
        %v456 = vld [vmem:[%s3 + $0x3a0] sm:$0xff]
        %v457 = vld [vmem:[%s3 + $0x3a8] sm:$0xff]
        %v458 = vld [vmem:[%s3 + $0x3b0] sm:$0xff]
        %v459 = vld [vmem:[%s3 + $0x3b8] sm:$0xff]
        %v460 = vld [vmem:[%s3 + $0x3c0] sm:$0xff]
        %v461 = vld [vmem:[%s3 + $0x3c8] sm:$0xff]
        %v462 = vld [vmem:[%s3 + $0x3d0] sm:$0xff]
        %v463 = vld [vmem:[%s3 + $0x3d8] sm:$0xff]
        %v464 = vld [vmem:[%s3 + $0x3e0] sm:$0xff]
        %v465 = vld [vmem:[%s3 + $0x3e8] sm:$0xff]
        %v466 = vld [vmem:[%s3 + $0x3f0] sm:$0xff]
        %v467 = vld [vmem:[%s3 + $0x3f8] sm:$0xff]
        %v468 = vld [vmem:[%s3 + $0x400] sm:$0xff]
        %v469 = vld [vmem:[%s3 + $0x408] sm:$0xff]
        %v470 = vld [vmem:[%s3 + $0x410] sm:$0xff]
        %v471 = vld [vmem:[%s3 + $0x418] sm:$0xff]
        %v472 = vld [vmem:[%s3 + $0x420] sm:$0xff]
        %v473 = vld [vmem:[%s3 + $0x428] sm:$0xff]
        %v474 = vld [vmem:[%s3 + $0x430] sm:$0xff]
        %v475 = vld [vmem:[%s3 + $0x438] sm:$0xff]
        %v476 = vld [vmem:[%s3 + $0x440] sm:$0xff]
        %v477 = vld [vmem:[%s3 + $0x448] sm:$0xff]
        %v478 = vld [vmem:[%s3 + $0x450] sm:$0xff]
        %v479 = vld [vmem:[%s3 + $0x458] sm:$0xff]
        %v480 = vld [vmem:[%s3 + $0x460] sm:$0xff]
        %v481 = vld [vmem:[%s3 + $0x468] sm:$0xff]
        %v482 = vld [vmem:[%s3 + $0x470] sm:$0xff]
        %v483 = vld [vmem:[%s3 + $0x478] sm:$0xff]
        %v484 = vld [vmem:[%s3 + $0x480] sm:$0xff]
        %v485 = vld [vmem:[%s3 + $0x488] sm:$0xff]
        %v486 = vld [vmem:[%s3 + $0x490] sm:$0xff]
        %v487 = vld [vmem:[%s3 + $0x498] sm:$0xff]
        %v488 = vld [vmem:[%s3 + $0x4a0] sm:$0xff]
        %v489 = vld [vmem:[%s3 + $0x4a8] sm:$0xff]
        %v490 = vld [vmem:[%s3 + $0x4b0] sm:$0xff]
        %v491 = vld [vmem:[%s3 + $0x4b8] sm:$0xff]
        %v492 = vld [vmem:[%s3 + $0x4c0] sm:$0xff]
        %v493 = vld [vmem:[%s3 + $0x4c8] sm:$0xff]
        %v494 = vld [vmem:[%s3 + $0x4d0] sm:$0xff]
        %v495 = vld [vmem:[%s3 + $0x4d8] sm:$0xff]
        %v496 = vld [vmem:[%s3 + $0x4e0] sm:$0xff]
        %v497 = vld [vmem:[%s3 + $0x4e8] sm:$0xff]
        %v498 = vld [vmem:[%s3 + $0x4f0] sm:$0xff]
        %v499 = vld [vmem:[%s3 + $0x4f8] sm:$0xff]
        %v500 = vld [vmem:[%s3 + $0x500] sm:$0xff]
        %v501 = vld [vmem:[%s3 + $0x508] sm:$0xff]
        %v502 = vld [vmem:[%s3 + $0x510] sm:$0xff]
        %v503 = vld [vmem:[%s3 + $0x518] sm:$0xff]
        %v504 = vld [vmem:[%s3 + $0x520] sm:$0xff]
        %v505 = vld [vmem:[%s3 + $0x528] sm:$0xff]
        %v506 = vld [vmem:[%s3 + $0x530] sm:$0xff]
        %v507 = vld [vmem:[%s3 + $0x538] sm:$0xff]
        %v508 = vld [vmem:[%s336] sm:$0x77]
        %v510 = vcombine.high %v508, %v508
        %vm511 = vcmask 23552
        %v513 = vsel %vm511, %v340, 0
        %v516 = vsel %vm511, %v341, 0
        %v519 = vsel %vm511, %v342, 0
        %v522 = vsel %vm511, %v343, 0
        %v525 = vsel %vm511, %v344, 0
        %v528 = vsel %vm511, %v345, 0
        %v531 = vsel %vm511, %v346, 0
        %v534 = vsel %vm511, %v347, 0
        %v537 = vsel %vm511, %v348, 0
        %v540 = vsel %vm511, %v349, 0
        %v543 = vsel %vm511, %v350, 0
        %v546 = vsel %vm511, %v351, 0
        %v549 = vsel %vm511, %v352, 0
        %v552 = vsel %vm511, %v353, 0
        %v555 = vsel %vm511, %v354, 0
        %v558 = vsel %vm511, %v355, 0
        %v561 = vsel %vm511, %v356, 0
        %v564 = vsel %vm511, %v357, 0
        %v567 = vsel %vm511, %v358, 0
        %v570 = vsel %vm511, %v359, 0
        %v573 = vsel %vm511, %v360, 0
        %v576 = vsel %vm511, %v361, 0
        %v579 = vsel %vm511, %v362, 0
        %v582 = vsel %vm511, %v363, 0
        %v585 = vsel %vm511, %v364, 0
        %v588 = vsel %vm511, %v365, 0
        %v591 = vsel %vm511, %v366, 0
        %v594 = vsel %vm511, %v367, 0
        %v597 = vsel %vm511, %v368, 0
        %v600 = vsel %vm511, %v369, 0
        %v603 = vsel %vm511, %v370, 0
        %v606 = vsel %vm511, %v371, 0
        %v609 = vsel %vm511, %v372, 0
        %v612 = vsel %vm511, %v373, 0
        %v615 = vsel %vm511, %v374, 0
        %v618 = vsel %vm511, %v375, 0
        %v621 = vsel %vm511, %v376, 0
        %v624 = vsel %vm511, %v377, 0
        %v627 = vsel %vm511, %v378, 0
        %v630 = vsel %vm511, %v379, 0
        %v633 = vsel %vm511, %v380, 0
        %v636 = vsel %vm511, %v381, 0
        %v639 = vsel %vm511, %v382, 0
        %v642 = vsel %vm511, %v383, 0
        %v645 = vsel %vm511, %v384, 0
        %v648 = vsel %vm511, %v385, 0
        %v651 = vsel %vm511, %v386, 0
        %v654 = vsel %vm511, %v387, 0
        %v657 = vsel %vm511, %v388, 0
        %v660 = vsel %vm511, %v389, 0
        %v663 = vsel %vm511, %v390, 0
        %v666 = vsel %vm511, %v391, 0
        %v669 = vsel %vm511, %v392, 0
        %v672 = vsel %vm511, %v393, 0
        %v675 = vsel %vm511, %v394, 0
        %v678 = vsel %vm511, %v395, 0
        %v681 = vsel %vm511, %v396, 0
        %v684 = vsel %vm511, %v397, 0
        %v687 = vsel %vm511, %v398, 0
        %v690 = vsel %vm511, %v399, 0
        %v693 = vsel %vm511, %v400, 0
        %v696 = vsel %vm511, %v401, 0
        %v699 = vsel %vm511, %v402, 0
        %v702 = vsel %vm511, %v403, 0
        %v705 = vsel %vm511, %v404, 0
        %v708 = vsel %vm511, %v405, 0
        %v711 = vsel %vm511, %v406, 0
        %v714 = vsel %vm511, %v407, 0
        %v717 = vsel %vm511, %v408, 0
        %v720 = vsel %vm511, %v409, 0
        %v723 = vsel %vm511, %v410, 0
        %v726 = vsel %vm511, %v411, 0
        %v729 = vsel %vm511, %v412, 0
        %v732 = vsel %vm511, %v413, 0
        %v735 = vsel %vm511, %v414, 0
        %v738 = vsel %vm511, %v415, 0
        %v741 = vsel %vm511, %v416, 0
        %v744 = vsel %vm511, %v417, 0
        %v747 = vsel %vm511, %v418, 0
        %v750 = vsel %vm511, %v419, 0
        %v753 = vsel %vm511, %v420, 0
        %v756 = vsel %vm511, %v421, 0
        %v759 = vsel %vm511, %v422, 0
        %v762 = vsel %vm511, %v423, 0
        %v765 = vsel %vm511, %v424, 0
        %v768 = vsel %vm511, %v425, 0
        %v771 = vsel %vm511, %v426, 0
        %v774 = vsel %vm511, %v427, 0
        %v777 = vsel %vm511, %v428, 0
        %v780 = vsel %vm511, %v429, 0
        %v783 = vsel %vm511, %v430, 0
        %v786 = vsel %vm511, %v431, 0
        %v789 = vsel %vm511, %v432, 0
        %v792 = vsel %vm511, %v433, 0
        %v795 = vsel %vm511, %v434, 0
        %v798 = vsel %vm511, %v435, 0
        %v801 = vsel %vm511, %v436, 0
        %v804 = vsel %vm511, %v437, 0
        %v807 = vsel %vm511, %v438, 0
        %v810 = vsel %vm511, %v439, 0
        %v813 = vsel %vm511, %v440, 0
        %v816 = vsel %vm511, %v441, 0
        %v819 = vsel %vm511, %v442, 0
        %v822 = vsel %vm511, %v443, 0
        %v825 = vsel %vm511, %v444, 0
        %v828 = vsel %vm511, %v445, 0
        %v831 = vsel %vm511, %v446, 0
        %v834 = vsel %vm511, %v447, 0
        %v837 = vsel %vm511, %v448, 0
        %v840 = vsel %vm511, %v449, 0
        %v843 = vsel %vm511, %v450, 0
        %v846 = vsel %vm511, %v451, 0
        %v849 = vsel %vm511, %v452, 0
        %v852 = vsel %vm511, %v453, 0
        %v855 = vsel %vm511, %v454, 0
        %v858 = vsel %vm511, %v455, 0
        %v861 = vsel %vm511, %v456, 0
        %v864 = vsel %vm511, %v457, 0
        %v867 = vsel %vm511, %v458, 0
        %v870 = vsel %vm511, %v459, 0
        %v873 = vsel %vm511, %v460, 0
        %v876 = vsel %vm511, %v461, 0
        %v879 = vsel %vm511, %v462, 0
        %v882 = vsel %vm511, %v463, 0
        %v885 = vsel %vm511, %v464, 0
        %v888 = vsel %vm511, %v465, 0
        %v891 = vsel %vm511, %v466, 0
        %v894 = vsel %vm511, %v467, 0
        %v897 = vsel %vm511, %v468, 0
        %v900 = vsel %vm511, %v469, 0
        %v903 = vsel %vm511, %v470, 0
        %v906 = vsel %vm511, %v471, 0
        %v909 = vsel %vm511, %v472, 0
        %v912 = vsel %vm511, %v473, 0
        %v915 = vsel %vm511, %v474, 0
        %v918 = vsel %vm511, %v475, 0
        %v921 = vsel %vm511, %v476, 0
        %v924 = vsel %vm511, %v477, 0
        %v927 = vsel %vm511, %v478, 0
        %v930 = vsel %vm511, %v479, 0
        %v933 = vsel %vm511, %v480, 0
        %v936 = vsel %vm511, %v481, 0
        %v939 = vsel %vm511, %v482, 0
        %v942 = vsel %vm511, %v483, 0
        %v945 = vsel %vm511, %v484, 0
        %v948 = vsel %vm511, %v485, 0
        %v951 = vsel %vm511, %v486, 0
        %v954 = vsel %vm511, %v487, 0
        %v957 = vsel %vm511, %v488, 0
        %v960 = vsel %vm511, %v489, 0
        %v963 = vsel %vm511, %v490, 0
        %v966 = vsel %vm511, %v491, 0
        %v969 = vsel %vm511, %v492, 0
        %v972 = vsel %vm511, %v493, 0
        %v975 = vsel %vm511, %v494, 0
        %v978 = vsel %vm511, %v495, 0
        %v981 = vsel %vm511, %v496, 0
        %v984 = vsel %vm511, %v497, 0
        %v987 = vsel %vm511, %v498, 0
        %v990 = vsel %vm511, %v499, 0
        %v993 = vsel %vm511, %v500, 0
        %v996 = vsel %vm511, %v501, 0
        %v999 = vsel %vm511, %v502, 0
        %v1002 = vsel %vm511, %v503, 0
        %v1005 = vsel %vm511, %v504, 0
        %v1008 = vsel %vm511, %v505, 0
        %v1011 = vsel %vm511, %v506, 0
        %v1014 = vsel %vm511, %v507, 0
        %vm1016 = vcmask 1042432
        %v1017 = vsel %vm1016, %v508, 0
        %v1019 = vsel %vm1016, %v510, 0
        %1021 = vmatprep.subr.mxu0 0.0
        %1022 = vmatpush1.msra.mxu0 0.0
        %1023 = vmatprep.subr.mxu0 0.0
        %1024 = vmatpush1.msra.mxu0 0.0
        %1025 = vmatprep.subr.mxu0 0.0
        %1026 = vmatpush1.msra.mxu0 0.0
        %1027 = vmatprep.subr.mxu0 0.0
        %1028 = vmatpush1.msra.mxu0 0.0
        %1029 = vmatprep.subr.mxu0 0.0
        %1030 = vmatpush1.msra.mxu0 0.0
        %1031 = vmatprep.subr.mxu0 0.0
        %1032 = vmatpush1.msra.mxu0 0.0
        %1033 = vmatprep.subr.mxu0 0.0
        %1034 = vmatpush1.msra.mxu0 0.0
        %1035 = vmatprep.subr.mxu0 0.0
        %1036 = vmatpush1.msra.mxu0 0.0
        %1037 = vmatprep.subr.mxu0 0.0
        %1038 = vmatpush1.msra.mxu0 0.0
        %1039 = vmatprep.subr.mxu0 0.0
        %1040 = vmatpush1.msra.mxu0 0.0
        %1041 = vmatprep.subr.mxu0 0.0
        %1042 = vmatpush1.msra.mxu0 0.0
        %1043 = vmatprep.subr.mxu0 0.0
        %1044 = vmatpush1.msra.mxu0 0.0
        %1045 = vmatprep.subr.mxu0 0.0
        %1046 = vmatpush1.msra.mxu0 0.0
        %1047 = vmatprep.subr.mxu0 0.0
        %1048 = vmatpush1.msra.mxu0 0.0
        %1049 = vmatprep.subr.mxu0 0.0
        %1050 = vmatpush1.msra.mxu0 0.0
        %1051 = vmatprep.subr.mxu0 %v1019
        %1052 = vmatpush1.msra.mxu0 %v1017
        %1053 = vmatprep.subr.mxu0 0.0
        %1054 = vmatpush2.msra.mxu0 0.0
        %1055 = vmatprep.subr.mxu0 0.0
        %1056 = vmatpush2.msra.mxu0 0.0
        %1057 = vmatprep.subr.mxu0 0.0
        %1058 = vmatpush2.msra.mxu0 0.0
        %1059 = vmatprep.subr.mxu0 0.0
        %1060 = vmatpush2.msra.mxu0 0.0
        %1061 = vmatprep.subr.mxu0 0.0
        %1062 = vmatpush2.msra.mxu0 0.0
        %1063 = vmatprep.subr.mxu0 0.0
        %1064 = vmatpush2.msra.mxu0 0.0
        %1065 = vmatprep.subr.mxu0 0.0
        %1066 = vmatpush2.msra.mxu0 0.0
        %1067 = vmatprep.subr.mxu0 0.0
        %1068 = vmatpush2.msra.mxu0 0.0
        %1069 = vmatprep.subr.mxu0 0.0
        %1070 = vmatpush2.msra.mxu0 0.0
        %1071 = vmatprep.subr.mxu0 0.0
        %1072 = vmatpush2.msra.mxu0 0.0
        %1073 = vmatprep.subr.mxu0 0.0
        %1074 = vmatpush2.msra.mxu0 0.0
        %1075 = vmatprep.subr.mxu0 0.0
        %1076 = vmatpush2.msra.mxu0 0.0
        %1077 = vmatprep.subr.mxu0 0.0
        %1078 = vmatpush2.msra.mxu0 0.0
        %1079 = vmatprep.subr.mxu0 0.0
        %1080 = vmatpush2.msra.mxu0 0.0
        %1081 = vmatprep.subr.mxu0 0.0
        %1082 = vmatpush2.msra.mxu0 0.0
        %1083 = vmatprep.subr.mxu0 0.0
        %1084 = vmatpush2.msra.mxu0 0.0
        %1085 = vmatprep.mubr.f32.mxu0 0.0
        %1086 = vmatmul.mubr.f32.gmra.mxu0 %v513
        %v1087 = vpop.f32.mrf.mxu0
        %v1088 = vadd.f32 0.0, %v1087
        %v1089 = vpop.f32.mrf.mxu0
        %v1090 = vadd.f32 0.0, %v1089
        %1091 = vmatprep.mubr.f32.mxu0 0.0
        %1092 = vmatmul.mubr.f32.gmra.mxu0 %v516
        %v1093 = vpop.f32.mrf.mxu0
        %v1094 = vadd.f32 0.0, %v1093
        %v1095 = vpop.f32.mrf.mxu0
        %v1096 = vadd.f32 0.0, %v1095
        %1097 = vmatprep.mubr.f32.mxu0 0.0
        %1098 = vmatmul.mubr.f32.gmra.mxu0 %v519
        %v1099 = vpop.f32.mrf.mxu0
        %v1100 = vadd.f32 0.0, %v1099
        %v1101 = vpop.f32.mrf.mxu0
        %v1102 = vadd.f32 0.0, %v1101
        %1103 = vmatprep.mubr.f32.mxu0 0.0
        %1104 = vmatmul.mubr.f32.gmra.mxu0 %v522
        %v1105 = vpop.f32.mrf.mxu0
        %v1106 = vadd.f32 0.0, %v1105
        %v1107 = vpop.f32.mrf.mxu0
        %v1108 = vadd.f32 0.0, %v1107
        %1109 = vmatprep.mubr.f32.mxu0 0.0
        %1110 = vmatmul.mubr.f32.gmra.mxu0 %v525
        %v1111 = vpop.f32.mrf.mxu0
        %v1112 = vadd.f32 0.0, %v1111
        %v1113 = vpop.f32.mrf.mxu0
        %v1114 = vadd.f32 0.0, %v1113
        %1115 = vmatprep.mubr.f32.mxu0 0.0
        %1116 = vmatmul.mubr.f32.gmra.mxu0 %v528
        %v1117 = vpop.f32.mrf.mxu0
        %v1118 = vadd.f32 0.0, %v1117
        %v1119 = vpop.f32.mrf.mxu0
        %v1120 = vadd.f32 0.0, %v1119
        %1121 = vmatprep.mubr.f32.mxu0 0.0
        %1122 = vmatmul.mubr.f32.gmra.mxu0 %v531
        %v1123 = vpop.f32.mrf.mxu0
        %v1124 = vadd.f32 0.0, %v1123
        %v1125 = vpop.f32.mrf.mxu0
        %v1126 = vadd.f32 0.0, %v1125
        %1127 = vmatprep.mubr.f32.mxu0 0.0
        %1128 = vmatmul.mubr.f32.gmra.mxu0 %v534
        %v1129 = vpop.f32.mrf.mxu0
        %v1130 = vadd.f32 0.0, %v1129
        %v1131 = vpop.f32.mrf.mxu0
        %v1132 = vadd.f32 0.0, %v1131
        %1133 = vmatprep.mubr.f32.mxu0 0.0
        %1134 = vmatmul.mubr.f32.gmra.mxu0 %v537
        %v1135 = vpop.f32.mrf.mxu0
        %v1136 = vadd.f32 0.0, %v1135
        %v1137 = vpop.f32.mrf.mxu0
        %v1138 = vadd.f32 0.0, %v1137
        %1139 = vmatprep.mubr.f32.mxu0 0.0
        %1140 = vmatmul.mubr.f32.gmra.mxu0 %v540
        %v1141 = vpop.f32.mrf.mxu0
        %v1142 = vadd.f32 0.0, %v1141
        %v1143 = vpop.f32.mrf.mxu0
        %v1144 = vadd.f32 0.0, %v1143
        %1145 = vmatprep.mubr.f32.mxu0 0.0
        %1146 = vmatmul.mubr.f32.gmra.mxu0 %v543
        %v1147 = vpop.f32.mrf.mxu0
        %v1148 = vadd.f32 0.0, %v1147
        %v1149 = vpop.f32.mrf.mxu0
        %v1150 = vadd.f32 0.0, %v1149
        %1151 = vmatprep.mubr.f32.mxu0 0.0
        %1152 = vmatmul.mubr.f32.gmra.mxu0 %v546
        %v1153 = vpop.f32.mrf.mxu0
        %v1154 = vadd.f32 0.0, %v1153
        %v1155 = vpop.f32.mrf.mxu0
        %v1156 = vadd.f32 0.0, %v1155
        %1157 = vmatprep.mubr.f32.mxu0 0.0
        %1158 = vmatmul.mubr.f32.gmra.mxu0 %v549
        %v1159 = vpop.f32.mrf.mxu0
        %v1160 = vadd.f32 0.0, %v1159
        %v1161 = vpop.f32.mrf.mxu0
        %v1162 = vadd.f32 0.0, %v1161
        %1163 = vmatprep.mubr.f32.mxu0 0.0
        %1164 = vmatmul.mubr.f32.gmra.mxu0 %v552
        %v1165 = vpop.f32.mrf.mxu0
        %v1166 = vadd.f32 0.0, %v1165
        %v1167 = vpop.f32.mrf.mxu0
        %v1168 = vadd.f32 0.0, %v1167
        %1169 = vmatprep.mubr.f32.mxu0 0.0
        %1170 = vmatmul.mubr.f32.gmra.mxu0 %v555
        %v1171 = vpop.f32.mrf.mxu0
        %v1172 = vadd.f32 0.0, %v1171
        %v1173 = vpop.f32.mrf.mxu0
        %v1174 = vadd.f32 0.0, %v1173
        %1175 = vmatprep.mubr.f32.mxu0 0.0
        %1176 = vmatmul.mubr.f32.gmra.mxu0 %v558
        %v1177 = vpop.f32.mrf.mxu0
        %v1178 = vadd.f32 0.0, %v1177
        %v1179 = vpop.f32.mrf.mxu0
        %v1180 = vadd.f32 0.0, %v1179
        %1181 = vmatprep.mubr.f32.mxu0 0.0
        %1182 = vmatmul.mubr.f32.gmra.mxu0 %v561
        %v1183 = vpop.f32.mrf.mxu0
        %v1184 = vadd.f32 0.0, %v1183
        %v1185 = vpop.f32.mrf.mxu0
        %v1186 = vadd.f32 0.0, %v1185
        %1187 = vmatprep.mubr.f32.mxu0 0.0
        %1188 = vmatmul.mubr.f32.gmra.mxu0 %v564
        %v1189 = vpop.f32.mrf.mxu0
        %v1190 = vadd.f32 0.0, %v1189
        %v1191 = vpop.f32.mrf.mxu0
        %v1192 = vadd.f32 0.0, %v1191
        %1193 = vmatprep.mubr.f32.mxu0 0.0
        %1194 = vmatmul.mubr.f32.gmra.mxu0 %v567
        %v1195 = vpop.f32.mrf.mxu0
        %v1196 = vadd.f32 0.0, %v1195
        %v1197 = vpop.f32.mrf.mxu0
        %v1198 = vadd.f32 0.0, %v1197
        %1199 = vmatprep.mubr.f32.mxu0 0.0
        %1200 = vmatmul.mubr.f32.gmra.mxu0 %v570
        %v1201 = vpop.f32.mrf.mxu0
        %v1202 = vadd.f32 0.0, %v1201
        %v1203 = vpop.f32.mrf.mxu0
        %v1204 = vadd.f32 0.0, %v1203
        %1205 = vmatprep.mubr.f32.mxu0 0.0
        %1206 = vmatmul.mubr.f32.gmra.mxu0 %v573
        %v1207 = vpop.f32.mrf.mxu0
        %v1208 = vadd.f32 0.0, %v1207
        %v1209 = vpop.f32.mrf.mxu0
        %v1210 = vadd.f32 0.0, %v1209
        %1211 = vmatprep.mubr.f32.mxu0 0.0
        %1212 = vmatmul.mubr.f32.gmra.mxu0 %v576
        %v1213 = vpop.f32.mrf.mxu0
        %v1214 = vadd.f32 0.0, %v1213
        %v1215 = vpop.f32.mrf.mxu0
        %v1216 = vadd.f32 0.0, %v1215
        %1217 = vmatprep.mubr.f32.mxu0 0.0
        %1218 = vmatmul.mubr.f32.gmra.mxu0 %v579
        %v1219 = vpop.f32.mrf.mxu0
        %v1220 = vadd.f32 0.0, %v1219
        %v1221 = vpop.f32.mrf.mxu0
        %v1222 = vadd.f32 0.0, %v1221
        %1223 = vmatprep.mubr.f32.mxu0 0.0
        %1224 = vmatmul.mubr.f32.gmra.mxu0 %v582
        %v1225 = vpop.f32.mrf.mxu0
        %v1226 = vadd.f32 0.0, %v1225
        %v1227 = vpop.f32.mrf.mxu0
        %v1228 = vadd.f32 0.0, %v1227
        %1229 = vmatprep.mubr.f32.mxu0 0.0
        %1230 = vmatmul.mubr.f32.gmra.mxu0 %v585
        %v1231 = vpop.f32.mrf.mxu0
        %v1232 = vadd.f32 0.0, %v1231
        %v1233 = vpop.f32.mrf.mxu0
        %v1234 = vadd.f32 0.0, %v1233
        %1235 = vmatprep.mubr.f32.mxu0 0.0
        %1236 = vmatmul.mubr.f32.gmra.mxu0 %v588
        %v1237 = vpop.f32.mrf.mxu0
        %v1238 = vadd.f32 0.0, %v1237
        %v1239 = vpop.f32.mrf.mxu0
        %v1240 = vadd.f32 0.0, %v1239
        %1241 = vmatprep.mubr.f32.mxu0 0.0
        %1242 = vmatmul.mubr.f32.gmra.mxu0 %v591
        %v1243 = vpop.f32.mrf.mxu0
        %v1244 = vadd.f32 0.0, %v1243
        %v1245 = vpop.f32.mrf.mxu0
        %v1246 = vadd.f32 0.0, %v1245
        %1247 = vmatprep.mubr.f32.mxu0 0.0
        %1248 = vmatmul.mubr.f32.gmra.mxu0 %v594
        %v1249 = vpop.f32.mrf.mxu0
        %v1250 = vadd.f32 0.0, %v1249
        %v1251 = vpop.f32.mrf.mxu0
        %v1252 = vadd.f32 0.0, %v1251
        %1253 = vmatprep.mubr.f32.mxu0 0.0
        %1254 = vmatmul.mubr.f32.gmra.mxu0 %v597
        %v1255 = vpop.f32.mrf.mxu0
        %v1256 = vadd.f32 0.0, %v1255
        %v1257 = vpop.f32.mrf.mxu0
        %v1258 = vadd.f32 0.0, %v1257
        %1259 = vmatprep.mubr.f32.mxu0 0.0
        %1260 = vmatmul.mubr.f32.gmra.mxu0 %v600
        %v1261 = vpop.f32.mrf.mxu0
        %v1262 = vadd.f32 0.0, %v1261
        %v1263 = vpop.f32.mrf.mxu0
        %v1264 = vadd.f32 0.0, %v1263
        %1265 = vmatprep.mubr.f32.mxu0 0.0
        %1266 = vmatmul.mubr.f32.gmra.mxu0 %v603
        %v1267 = vpop.f32.mrf.mxu0
        %v1268 = vadd.f32 0.0, %v1267
        %v1269 = vpop.f32.mrf.mxu0
        %v1270 = vadd.f32 0.0, %v1269
        %1271 = vmatprep.mubr.f32.mxu0 0.0
        %1272 = vmatmul.mubr.f32.gmra.mxu0 %v606
        %v1273 = vpop.f32.mrf.mxu0
        %v1274 = vadd.f32 0.0, %v1273
        %v1275 = vpop.f32.mrf.mxu0
        %v1276 = vadd.f32 0.0, %v1275
        %1277 = vmatprep.mubr.f32.mxu0 0.0
        %1278 = vmatmul.mubr.f32.gmra.mxu0 %v609
        %v1279 = vpop.f32.mrf.mxu0
        %v1280 = vadd.f32 0.0, %v1279
        %v1281 = vpop.f32.mrf.mxu0
        %v1282 = vadd.f32 0.0, %v1281
        %1283 = vmatprep.mubr.f32.mxu0 0.0
        %1284 = vmatmul.mubr.f32.gmra.mxu0 %v612
        %v1285 = vpop.f32.mrf.mxu0
        %v1286 = vadd.f32 0.0, %v1285
        %v1287 = vpop.f32.mrf.mxu0
        %v1288 = vadd.f32 0.0, %v1287
        %1289 = vmatprep.mubr.f32.mxu0 0.0
        %1290 = vmatmul.mubr.f32.gmra.mxu0 %v615
        %v1291 = vpop.f32.mrf.mxu0
        %v1292 = vadd.f32 0.0, %v1291
        %v1293 = vpop.f32.mrf.mxu0
        %v1294 = vadd.f32 0.0, %v1293
        %1295 = vmatprep.mubr.f32.mxu0 0.0
        %1296 = vmatmul.mubr.f32.gmra.mxu0 %v618
        %v1297 = vpop.f32.mrf.mxu0
        %v1298 = vadd.f32 0.0, %v1297
        %v1299 = vpop.f32.mrf.mxu0
        %v1300 = vadd.f32 0.0, %v1299
        %1301 = vmatprep.mubr.f32.mxu0 0.0
        %1302 = vmatmul.mubr.f32.gmra.mxu0 %v621
        %v1303 = vpop.f32.mrf.mxu0
        %v1304 = vadd.f32 0.0, %v1303
        %v1305 = vpop.f32.mrf.mxu0
        %v1306 = vadd.f32 0.0, %v1305
        %1307 = vmatprep.mubr.f32.mxu0 0.0
        %1308 = vmatmul.mubr.f32.gmra.mxu0 %v624
        %v1309 = vpop.f32.mrf.mxu0
        %v1310 = vadd.f32 0.0, %v1309
        %v1311 = vpop.f32.mrf.mxu0
        %v1312 = vadd.f32 0.0, %v1311
        %1313 = vmatprep.mubr.f32.mxu0 0.0
        %1314 = vmatmul.mubr.f32.gmra.mxu0 %v627
        %v1315 = vpop.f32.mrf.mxu0
        %v1316 = vadd.f32 0.0, %v1315
        %v1317 = vpop.f32.mrf.mxu0
        %v1318 = vadd.f32 0.0, %v1317
        %1319 = vmatprep.mubr.f32.mxu0 0.0
        %1320 = vmatmul.mubr.f32.gmra.mxu0 %v630
        %v1321 = vpop.f32.mrf.mxu0
        %v1322 = vadd.f32 0.0, %v1321
        %v1323 = vpop.f32.mrf.mxu0
        %v1324 = vadd.f32 0.0, %v1323
        %1325 = vmatprep.mubr.f32.mxu0 0.0
        %1326 = vmatmul.mubr.f32.gmra.mxu0 %v633
        %v1327 = vpop.f32.mrf.mxu0
        %v1328 = vadd.f32 0.0, %v1327
        %v1329 = vpop.f32.mrf.mxu0
        %v1330 = vadd.f32 0.0, %v1329
        %1331 = vmatprep.mubr.f32.mxu0 0.0
        %1332 = vmatmul.mubr.f32.gmra.mxu0 %v636
        %v1333 = vpop.f32.mrf.mxu0
        %v1334 = vadd.f32 0.0, %v1333
        %v1335 = vpop.f32.mrf.mxu0
        %v1336 = vadd.f32 0.0, %v1335
        %1337 = vmatprep.mubr.f32.mxu0 0.0
        %1338 = vmatmul.mubr.f32.gmra.mxu0 %v639
        %v1339 = vpop.f32.mrf.mxu0
        %v1340 = vadd.f32 0.0, %v1339
        %v1341 = vpop.f32.mrf.mxu0
        %v1342 = vadd.f32 0.0, %v1341
        %1343 = vmatprep.mubr.f32.mxu0 0.0
        %1344 = vmatmul.mubr.f32.gmra.mxu0 %v642
        %v1345 = vpop.f32.mrf.mxu0
        %v1346 = vadd.f32 0.0, %v1345
        %v1347 = vpop.f32.mrf.mxu0
        %v1348 = vadd.f32 0.0, %v1347
        %1349 = vmatprep.mubr.f32.mxu0 0.0
        %1350 = vmatmul.mubr.f32.gmra.mxu0 %v645
        %v1351 = vpop.f32.mrf.mxu0
        %v1352 = vadd.f32 0.0, %v1351
        %v1353 = vpop.f32.mrf.mxu0
        %v1354 = vadd.f32 0.0, %v1353
        %1355 = vmatprep.mubr.f32.mxu0 0.0
        %1356 = vmatmul.mubr.f32.gmra.mxu0 %v648
        %v1357 = vpop.f32.mrf.mxu0
        %v1358 = vadd.f32 0.0, %v1357
        %v1359 = vpop.f32.mrf.mxu0
        %v1360 = vadd.f32 0.0, %v1359
        %1361 = vmatprep.mubr.f32.mxu0 0.0
        %1362 = vmatmul.mubr.f32.gmra.mxu0 %v651
        %v1363 = vpop.f32.mrf.mxu0
        %v1364 = vadd.f32 0.0, %v1363
        %v1365 = vpop.f32.mrf.mxu0
        %v1366 = vadd.f32 0.0, %v1365
        %1367 = vmatprep.mubr.f32.mxu0 0.0
        %1368 = vmatmul.mubr.f32.gmra.mxu0 %v654
        %v1369 = vpop.f32.mrf.mxu0
        %v1370 = vadd.f32 0.0, %v1369
        %v1371 = vpop.f32.mrf.mxu0
        %v1372 = vadd.f32 0.0, %v1371
        %1373 = vmatprep.mubr.f32.mxu0 0.0
        %1374 = vmatmul.mubr.f32.gmra.mxu0 %v657
        %v1375 = vpop.f32.mrf.mxu0
        %v1376 = vadd.f32 0.0, %v1375
        %v1377 = vpop.f32.mrf.mxu0
        %v1378 = vadd.f32 0.0, %v1377
        %1379 = vmatprep.mubr.f32.mxu0 0.0
        %1380 = vmatmul.mubr.f32.gmra.mxu0 %v660
        %v1381 = vpop.f32.mrf.mxu0
        %v1382 = vadd.f32 0.0, %v1381
        %v1383 = vpop.f32.mrf.mxu0
        %v1384 = vadd.f32 0.0, %v1383
        %1385 = vmatprep.mubr.f32.mxu0 0.0
        %1386 = vmatmul.mubr.f32.gmra.mxu0 %v663
        %v1387 = vpop.f32.mrf.mxu0
        %v1388 = vadd.f32 0.0, %v1387
        %v1389 = vpop.f32.mrf.mxu0
        %v1390 = vadd.f32 0.0, %v1389
        %1391 = vmatprep.mubr.f32.mxu0 0.0
        %1392 = vmatmul.mubr.f32.gmra.mxu0 %v666
        %v1393 = vpop.f32.mrf.mxu0
        %v1394 = vadd.f32 0.0, %v1393
        %v1395 = vpop.f32.mrf.mxu0
        %v1396 = vadd.f32 0.0, %v1395
        %1397 = vmatprep.mubr.f32.mxu0 0.0
        %1398 = vmatmul.mubr.f32.gmra.mxu0 %v669
        %v1399 = vpop.f32.mrf.mxu0
        %v1400 = vadd.f32 0.0, %v1399
        %v1401 = vpop.f32.mrf.mxu0
        %v1402 = vadd.f32 0.0, %v1401
        %1403 = vmatprep.mubr.f32.mxu0 0.0
        %1404 = vmatmul.mubr.f32.gmra.mxu0 %v672
        %v1405 = vpop.f32.mrf.mxu0
        %v1406 = vadd.f32 0.0, %v1405
        %v1407 = vpop.f32.mrf.mxu0
        %v1408 = vadd.f32 0.0, %v1407
        %1409 = vmatprep.mubr.f32.mxu0 0.0
        %1410 = vmatmul.mubr.f32.gmra.mxu0 %v675
        %v1411 = vpop.f32.mrf.mxu0
        %v1412 = vadd.f32 0.0, %v1411
        %v1413 = vpop.f32.mrf.mxu0
        %v1414 = vadd.f32 0.0, %v1413
        %1415 = vmatprep.mubr.f32.mxu0 0.0
        %1416 = vmatmul.mubr.f32.gmra.mxu0 %v678
        %v1417 = vpop.f32.mrf.mxu0
        %v1418 = vadd.f32 0.0, %v1417
        %v1419 = vpop.f32.mrf.mxu0
        %v1420 = vadd.f32 0.0, %v1419
        %1421 = vmatprep.mubr.f32.mxu0 0.0
        %1422 = vmatmul.mubr.f32.gmra.mxu0 %v681
        %v1423 = vpop.f32.mrf.mxu0
        %v1424 = vadd.f32 0.0, %v1423
        %v1425 = vpop.f32.mrf.mxu0
        %v1426 = vadd.f32 0.0, %v1425
        %1427 = vmatprep.mubr.f32.mxu0 0.0
        %1428 = vmatmul.mubr.f32.gmra.mxu0 %v684
        %v1429 = vpop.f32.mrf.mxu0
        %v1430 = vadd.f32 0.0, %v1429
        %v1431 = vpop.f32.mrf.mxu0
        %v1432 = vadd.f32 0.0, %v1431
        %1433 = vmatprep.mubr.f32.mxu0 0.0
        %1434 = vmatmul.mubr.f32.gmra.mxu0 %v687
        %v1435 = vpop.f32.mrf.mxu0
        %v1436 = vadd.f32 0.0, %v1435
        %v1437 = vpop.f32.mrf.mxu0
        %v1438 = vadd.f32 0.0, %v1437
        %1439 = vmatprep.mubr.f32.mxu0 0.0
        %1440 = vmatmul.mubr.f32.gmra.mxu0 %v690
        %v1441 = vpop.f32.mrf.mxu0
        %v1442 = vadd.f32 0.0, %v1441
        %v1443 = vpop.f32.mrf.mxu0
        %v1444 = vadd.f32 0.0, %v1443
        %1445 = vmatprep.mubr.f32.mxu0 0.0
        %1446 = vmatmul.mubr.f32.gmra.mxu0 %v693
        %v1447 = vpop.f32.mrf.mxu0
        %v1448 = vadd.f32 0.0, %v1447
        %v1449 = vpop.f32.mrf.mxu0
        %v1450 = vadd.f32 0.0, %v1449
        %1451 = vmatprep.mubr.f32.mxu0 0.0
        %1452 = vmatmul.mubr.f32.gmra.mxu0 %v696
        %v1453 = vpop.f32.mrf.mxu0
        %v1454 = vadd.f32 0.0, %v1453
        %v1455 = vpop.f32.mrf.mxu0
        %v1456 = vadd.f32 0.0, %v1455
        %1457 = vmatprep.mubr.f32.mxu0 0.0
        %1458 = vmatmul.mubr.f32.gmra.mxu0 %v699
        %v1459 = vpop.f32.mrf.mxu0
        %v1460 = vadd.f32 0.0, %v1459
        %v1461 = vpop.f32.mrf.mxu0
        %v1462 = vadd.f32 0.0, %v1461
        %1463 = vmatprep.mubr.f32.mxu0 0.0
        %1464 = vmatmul.mubr.f32.gmra.mxu0 %v702
        %v1465 = vpop.f32.mrf.mxu0
        %v1466 = vadd.f32 0.0, %v1465
        %v1467 = vpop.f32.mrf.mxu0
        %v1468 = vadd.f32 0.0, %v1467
        %1469 = vmatprep.mubr.f32.mxu0 0.0
        %1470 = vmatmul.mubr.f32.gmra.mxu0 %v705
        %v1471 = vpop.f32.mrf.mxu0
        %v1472 = vadd.f32 0.0, %v1471
        %v1473 = vpop.f32.mrf.mxu0
        %v1474 = vadd.f32 0.0, %v1473
        %1475 = vmatprep.mubr.f32.mxu0 0.0
        %1476 = vmatmul.mubr.f32.gmra.mxu0 %v708
        %v1477 = vpop.f32.mrf.mxu0
        %v1478 = vadd.f32 0.0, %v1477
        %v1479 = vpop.f32.mrf.mxu0
        %v1480 = vadd.f32 0.0, %v1479
        %1481 = vmatprep.mubr.f32.mxu0 0.0
        %1482 = vmatmul.mubr.f32.gmra.mxu0 %v711
        %v1483 = vpop.f32.mrf.mxu0
        %v1484 = vadd.f32 0.0, %v1483
        %v1485 = vpop.f32.mrf.mxu0
        %v1486 = vadd.f32 0.0, %v1485
        %1487 = vmatprep.mubr.f32.mxu0 0.0
        %1488 = vmatmul.mubr.f32.gmra.mxu0 %v714
        %v1489 = vpop.f32.mrf.mxu0
        %v1490 = vadd.f32 0.0, %v1489
        %v1491 = vpop.f32.mrf.mxu0
        %v1492 = vadd.f32 0.0, %v1491
        %1493 = vmatprep.mubr.f32.mxu0 0.0
        %1494 = vmatmul.mubr.f32.gmra.mxu0 %v717
        %v1495 = vpop.f32.mrf.mxu0
        %v1496 = vadd.f32 0.0, %v1495
        %v1497 = vpop.f32.mrf.mxu0
        %v1498 = vadd.f32 0.0, %v1497
        %1499 = vmatprep.mubr.f32.mxu0 0.0
        %1500 = vmatmul.mubr.f32.gmra.mxu0 %v720
        %v1501 = vpop.f32.mrf.mxu0
        %v1502 = vadd.f32 0.0, %v1501
        %v1503 = vpop.f32.mrf.mxu0
        %v1504 = vadd.f32 0.0, %v1503
        %1505 = vmatprep.mubr.f32.mxu0 0.0
        %1506 = vmatmul.mubr.f32.gmra.mxu0 %v723
        %v1507 = vpop.f32.mrf.mxu0
        %v1508 = vadd.f32 0.0, %v1507
        %v1509 = vpop.f32.mrf.mxu0
        %v1510 = vadd.f32 0.0, %v1509
        %1511 = vmatprep.mubr.f32.mxu0 0.0
        %1512 = vmatmul.mubr.f32.gmra.mxu0 %v726
        %v1513 = vpop.f32.mrf.mxu0
        %v1514 = vadd.f32 0.0, %v1513
        %v1515 = vpop.f32.mrf.mxu0
        %v1516 = vadd.f32 0.0, %v1515
        %1517 = vmatprep.mubr.f32.mxu0 0.0
        %1518 = vmatmul.mubr.f32.gmra.mxu0 %v729
        %v1519 = vpop.f32.mrf.mxu0
        %v1520 = vadd.f32 0.0, %v1519
        %v1521 = vpop.f32.mrf.mxu0
        %v1522 = vadd.f32 0.0, %v1521
        %1523 = vmatprep.mubr.f32.mxu0 0.0
        %1524 = vmatmul.mubr.f32.gmra.mxu0 %v732
        %v1525 = vpop.f32.mrf.mxu0
        %v1526 = vadd.f32 0.0, %v1525
        %v1527 = vpop.f32.mrf.mxu0
        %v1528 = vadd.f32 0.0, %v1527
        %1529 = vmatprep.mubr.f32.mxu0 0.0
        %1530 = vmatmul.mubr.f32.gmra.mxu0 %v735
        %v1531 = vpop.f32.mrf.mxu0
        %v1532 = vadd.f32 0.0, %v1531
        %v1533 = vpop.f32.mrf.mxu0
        %v1534 = vadd.f32 0.0, %v1533
        %1535 = vmatprep.mubr.f32.mxu0 0.0
        %1536 = vmatmul.mubr.f32.gmra.mxu0 %v738
        %v1537 = vpop.f32.mrf.mxu0
        %v1538 = vadd.f32 0.0, %v1537
        %v1539 = vpop.f32.mrf.mxu0
        %v1540 = vadd.f32 0.0, %v1539
        %1541 = vmatprep.mubr.f32.mxu0 0.0
        %1542 = vmatmul.mubr.f32.gmra.mxu0 %v741
        %v1543 = vpop.f32.mrf.mxu0
        %v1544 = vadd.f32 0.0, %v1543
        %v1545 = vpop.f32.mrf.mxu0
        %v1546 = vadd.f32 0.0, %v1545
        %1547 = vmatprep.mubr.f32.mxu0 0.0
        %1548 = vmatmul.mubr.f32.gmra.mxu0 %v744
        %v1549 = vpop.f32.mrf.mxu0
        %v1550 = vadd.f32 0.0, %v1549
        %v1551 = vpop.f32.mrf.mxu0
        %v1552 = vadd.f32 0.0, %v1551
        %1553 = vmatprep.mubr.f32.mxu0 0.0
        %1554 = vmatmul.mubr.f32.gmra.mxu0 %v747
        %v1555 = vpop.f32.mrf.mxu0
        %v1556 = vadd.f32 0.0, %v1555
        %v1557 = vpop.f32.mrf.mxu0
        %v1558 = vadd.f32 0.0, %v1557
        %1559 = vmatprep.mubr.f32.mxu0 0.0
        %1560 = vmatmul.mubr.f32.gmra.mxu0 %v750
        %v1561 = vpop.f32.mrf.mxu0
        %v1562 = vadd.f32 0.0, %v1561
        %v1563 = vpop.f32.mrf.mxu0
        %v1564 = vadd.f32 0.0, %v1563
        %1565 = vmatprep.mubr.f32.mxu0 0.0
        %1566 = vmatmul.mubr.f32.gmra.mxu0 %v753
        %v1567 = vpop.f32.mrf.mxu0
        %v1568 = vadd.f32 0.0, %v1567
        %v1569 = vpop.f32.mrf.mxu0
        %v1570 = vadd.f32 0.0, %v1569
        %1571 = vmatprep.mubr.f32.mxu0 0.0
        %1572 = vmatmul.mubr.f32.gmra.mxu0 %v756
        %v1573 = vpop.f32.mrf.mxu0
        %v1574 = vadd.f32 0.0, %v1573
        %v1575 = vpop.f32.mrf.mxu0
        %v1576 = vadd.f32 0.0, %v1575
        %1577 = vmatprep.mubr.f32.mxu0 0.0
        %1578 = vmatmul.mubr.f32.gmra.mxu0 %v759
        %v1579 = vpop.f32.mrf.mxu0
        %v1580 = vadd.f32 0.0, %v1579
        %v1581 = vpop.f32.mrf.mxu0
        %v1582 = vadd.f32 0.0, %v1581
        %1583 = vmatprep.mubr.f32.mxu0 0.0
        %1584 = vmatmul.mubr.f32.gmra.mxu0 %v762
        %v1585 = vpop.f32.mrf.mxu0
        %v1586 = vadd.f32 0.0, %v1585
        %v1587 = vpop.f32.mrf.mxu0
        %v1588 = vadd.f32 0.0, %v1587
        %1589 = vmatprep.mubr.f32.mxu0 0.0
        %1590 = vmatmul.mubr.f32.gmra.mxu0 %v765
        %v1591 = vpop.f32.mrf.mxu0
        %v1592 = vadd.f32 0.0, %v1591
        %v1593 = vpop.f32.mrf.mxu0
        %v1594 = vadd.f32 0.0, %v1593
        %1595 = vmatprep.mubr.f32.mxu0 0.0
        %1596 = vmatmul.mubr.f32.gmra.mxu0 %v768
        %v1597 = vpop.f32.mrf.mxu0
        %v1598 = vadd.f32 0.0, %v1597
        %v1599 = vpop.f32.mrf.mxu0
        %v1600 = vadd.f32 0.0, %v1599
        %1601 = vmatprep.mubr.f32.mxu0 0.0
        %1602 = vmatmul.mubr.f32.gmra.mxu0 %v771
        %v1603 = vpop.f32.mrf.mxu0
        %v1604 = vadd.f32 0.0, %v1603
        %v1605 = vpop.f32.mrf.mxu0
        %v1606 = vadd.f32 0.0, %v1605
        %1607 = vmatprep.mubr.f32.mxu0 0.0
        %1608 = vmatmul.mubr.f32.gmra.mxu0 %v774
        %v1609 = vpop.f32.mrf.mxu0
        %v1610 = vadd.f32 0.0, %v1609
        %v1611 = vpop.f32.mrf.mxu0
        %v1612 = vadd.f32 0.0, %v1611
        %1613 = vmatprep.mubr.f32.mxu0 0.0
        %1614 = vmatmul.mubr.f32.gmra.mxu0 %v777
        %v1615 = vpop.f32.mrf.mxu0
        %v1616 = vadd.f32 0.0, %v1615
        %v1617 = vpop.f32.mrf.mxu0
        %v1618 = vadd.f32 0.0, %v1617
        %1619 = vmatprep.mubr.f32.mxu0 0.0
        %1620 = vmatmul.mubr.f32.gmra.mxu0 %v780
        %v1621 = vpop.f32.mrf.mxu0
        %v1622 = vadd.f32 0.0, %v1621
        %v1623 = vpop.f32.mrf.mxu0
        %v1624 = vadd.f32 0.0, %v1623
        %1625 = vmatprep.mubr.f32.mxu0 0.0
        %1626 = vmatmul.mubr.f32.gmra.mxu0 %v783
        %v1627 = vpop.f32.mrf.mxu0
        %v1628 = vadd.f32 0.0, %v1627
        %v1629 = vpop.f32.mrf.mxu0
        %v1630 = vadd.f32 0.0, %v1629
        %1631 = vmatprep.mubr.f32.mxu0 0.0
        %1632 = vmatmul.mubr.f32.gmra.mxu0 %v786
        %v1633 = vpop.f32.mrf.mxu0
        %v1634 = vadd.f32 0.0, %v1633
        %v1635 = vpop.f32.mrf.mxu0
        %v1636 = vadd.f32 0.0, %v1635
        %1637 = vmatprep.mubr.f32.mxu0 0.0
        %1638 = vmatmul.mubr.f32.gmra.mxu0 %v789
        %v1639 = vpop.f32.mrf.mxu0
        %v1640 = vadd.f32 0.0, %v1639
        %v1641 = vpop.f32.mrf.mxu0
        %v1642 = vadd.f32 0.0, %v1641
        %1643 = vmatprep.mubr.f32.mxu0 0.0
        %1644 = vmatmul.mubr.f32.gmra.mxu0 %v792
        %v1645 = vpop.f32.mrf.mxu0
        %v1646 = vadd.f32 0.0, %v1645
        %v1647 = vpop.f32.mrf.mxu0
        %v1648 = vadd.f32 0.0, %v1647
        %1649 = vmatprep.mubr.f32.mxu0 0.0
        %1650 = vmatmul.mubr.f32.gmra.mxu0 %v795
        %v1651 = vpop.f32.mrf.mxu0
        %v1652 = vadd.f32 0.0, %v1651
        %v1653 = vpop.f32.mrf.mxu0
        %v1654 = vadd.f32 0.0, %v1653
        %1655 = vmatprep.mubr.f32.mxu0 0.0
        %1656 = vmatmul.mubr.f32.gmra.mxu0 %v798
        %v1657 = vpop.f32.mrf.mxu0
        %v1658 = vadd.f32 0.0, %v1657
        %v1659 = vpop.f32.mrf.mxu0
        %v1660 = vadd.f32 0.0, %v1659
        %1661 = vmatprep.mubr.f32.mxu0 0.0
        %1662 = vmatmul.mubr.f32.gmra.mxu0 %v801
        %v1663 = vpop.f32.mrf.mxu0
        %v1664 = vadd.f32 0.0, %v1663
        %v1665 = vpop.f32.mrf.mxu0
        %v1666 = vadd.f32 0.0, %v1665
        %1667 = vmatprep.mubr.f32.mxu0 0.0
        %1668 = vmatmul.mubr.f32.gmra.mxu0 %v804
        %v1669 = vpop.f32.mrf.mxu0
        %v1670 = vadd.f32 0.0, %v1669
        %v1671 = vpop.f32.mrf.mxu0
        %v1672 = vadd.f32 0.0, %v1671
        %1673 = vmatprep.mubr.f32.mxu0 0.0
        %1674 = vmatmul.mubr.f32.gmra.mxu0 %v807
        %v1675 = vpop.f32.mrf.mxu0
        %v1676 = vadd.f32 0.0, %v1675
        %v1677 = vpop.f32.mrf.mxu0
        %v1678 = vadd.f32 0.0, %v1677
        %1679 = vmatprep.mubr.f32.mxu0 0.0
        %1680 = vmatmul.mubr.f32.gmra.mxu0 %v810
        %v1681 = vpop.f32.mrf.mxu0
        %v1682 = vadd.f32 0.0, %v1681
        %v1683 = vpop.f32.mrf.mxu0
        %v1684 = vadd.f32 0.0, %v1683
        %1685 = vmatprep.mubr.f32.mxu0 0.0
        %1686 = vmatmul.mubr.f32.gmra.mxu0 %v813
        %v1687 = vpop.f32.mrf.mxu0
        %v1688 = vadd.f32 0.0, %v1687
        %v1689 = vpop.f32.mrf.mxu0
        %v1690 = vadd.f32 0.0, %v1689
        %1691 = vmatprep.mubr.f32.mxu0 0.0
        %1692 = vmatmul.mubr.f32.gmra.mxu0 %v816
        %v1693 = vpop.f32.mrf.mxu0
        %v1694 = vadd.f32 0.0, %v1693
        %v1695 = vpop.f32.mrf.mxu0
        %v1696 = vadd.f32 0.0, %v1695
        %1697 = vmatprep.mubr.f32.mxu0 0.0
        %1698 = vmatmul.mubr.f32.gmra.mxu0 %v819
        %v1699 = vpop.f32.mrf.mxu0
        %v1700 = vadd.f32 0.0, %v1699
        %v1701 = vpop.f32.mrf.mxu0
        %v1702 = vadd.f32 0.0, %v1701
        %1703 = vmatprep.mubr.f32.mxu0 0.0
        %1704 = vmatmul.mubr.f32.gmra.mxu0 %v822
        %v1705 = vpop.f32.mrf.mxu0
        %v1706 = vadd.f32 0.0, %v1705
        %v1707 = vpop.f32.mrf.mxu0
        %v1708 = vadd.f32 0.0, %v1707
        %1709 = vmatprep.mubr.f32.mxu0 0.0
        %1710 = vmatmul.mubr.f32.gmra.mxu0 %v825
        %v1711 = vpop.f32.mrf.mxu0
        %v1712 = vadd.f32 0.0, %v1711
        %v1713 = vpop.f32.mrf.mxu0
        %v1714 = vadd.f32 0.0, %v1713
        %1715 = vmatprep.mubr.f32.mxu0 0.0
        %1716 = vmatmul.mubr.f32.gmra.mxu0 %v828
        %v1717 = vpop.f32.mrf.mxu0
        %v1718 = vadd.f32 0.0, %v1717
        %v1719 = vpop.f32.mrf.mxu0
        %v1720 = vadd.f32 0.0, %v1719
        %1721 = vmatprep.mubr.f32.mxu0 0.0
        %1722 = vmatmul.mubr.f32.gmra.mxu0 %v831
        %v1723 = vpop.f32.mrf.mxu0
        %v1724 = vadd.f32 0.0, %v1723
        %v1725 = vpop.f32.mrf.mxu0
        %v1726 = vadd.f32 0.0, %v1725
        %1727 = vmatprep.mubr.f32.mxu0 0.0
        %1728 = vmatmul.mubr.f32.gmra.mxu0 %v834
        %v1729 = vpop.f32.mrf.mxu0
        %v1730 = vadd.f32 0.0, %v1729
        %v1731 = vpop.f32.mrf.mxu0
        %v1732 = vadd.f32 0.0, %v1731
        %1733 = vmatprep.mubr.f32.mxu0 0.0
        %1734 = vmatmul.mubr.f32.gmra.mxu0 %v837
        %v1735 = vpop.f32.mrf.mxu0
        %v1736 = vadd.f32 0.0, %v1735
        %v1737 = vpop.f32.mrf.mxu0
        %v1738 = vadd.f32 0.0, %v1737
        %1739 = vmatprep.mubr.f32.mxu0 0.0
        %1740 = vmatmul.mubr.f32.gmra.mxu0 %v840
        %v1741 = vpop.f32.mrf.mxu0
        %v1742 = vadd.f32 0.0, %v1741
        %v1743 = vpop.f32.mrf.mxu0
        %v1744 = vadd.f32 0.0, %v1743
        %1745 = vmatprep.mubr.f32.mxu0 0.0
        %1746 = vmatmul.mubr.f32.gmra.mxu0 %v843
        %v1747 = vpop.f32.mrf.mxu0
        %v1748 = vadd.f32 0.0, %v1747
        %v1749 = vpop.f32.mrf.mxu0
        %v1750 = vadd.f32 0.0, %v1749
        %1751 = vmatprep.mubr.f32.mxu0 0.0
        %1752 = vmatmul.mubr.f32.gmra.mxu0 %v846
        %v1753 = vpop.f32.mrf.mxu0
        %v1754 = vadd.f32 0.0, %v1753
        %v1755 = vpop.f32.mrf.mxu0
        %v1756 = vadd.f32 0.0, %v1755
        %1757 = vmatprep.mubr.f32.mxu0 0.0
        %1758 = vmatmul.mubr.f32.gmra.mxu0 %v849
        %v1759 = vpop.f32.mrf.mxu0
        %v1760 = vadd.f32 0.0, %v1759
        %v1761 = vpop.f32.mrf.mxu0
        %v1762 = vadd.f32 0.0, %v1761
        %1763 = vmatprep.mubr.f32.mxu0 0.0
        %1764 = vmatmul.mubr.f32.gmra.mxu0 %v852
        %v1765 = vpop.f32.mrf.mxu0
        %v1766 = vadd.f32 0.0, %v1765
        %v1767 = vpop.f32.mrf.mxu0
        %v1768 = vadd.f32 0.0, %v1767
        %1769 = vmatprep.mubr.f32.mxu0 0.0
        %1770 = vmatmul.mubr.f32.gmra.mxu0 %v855
        %v1771 = vpop.f32.mrf.mxu0
        %v1772 = vadd.f32 0.0, %v1771
        %v1773 = vpop.f32.mrf.mxu0
        %v1774 = vadd.f32 0.0, %v1773
        %1775 = vmatprep.mubr.f32.mxu0 0.0
        %1776 = vmatmul.mubr.f32.gmra.mxu0 %v858
        %v1777 = vpop.f32.mrf.mxu0
        %v1778 = vadd.f32 0.0, %v1777
        %v1779 = vpop.f32.mrf.mxu0
        %v1780 = vadd.f32 0.0, %v1779
        %1781 = vmatprep.mubr.f32.mxu0 0.0
        %1782 = vmatmul.mubr.f32.gmra.mxu0 %v861
        %v1783 = vpop.f32.mrf.mxu0
        %v1784 = vadd.f32 0.0, %v1783
        %v1785 = vpop.f32.mrf.mxu0
        %v1786 = vadd.f32 0.0, %v1785
        %1787 = vmatprep.mubr.f32.mxu0 0.0
        %1788 = vmatmul.mubr.f32.gmra.mxu0 %v864
        %v1789 = vpop.f32.mrf.mxu0
        %v1790 = vadd.f32 0.0, %v1789
        %v1791 = vpop.f32.mrf.mxu0
        %v1792 = vadd.f32 0.0, %v1791
        %1793 = vmatprep.mubr.f32.mxu0 0.0
        %1794 = vmatmul.mubr.f32.gmra.mxu0 %v867
        %v1795 = vpop.f32.mrf.mxu0
        %v1796 = vadd.f32 0.0, %v1795
        %v1797 = vpop.f32.mrf.mxu0
        %v1798 = vadd.f32 0.0, %v1797
        %1799 = vmatprep.mubr.f32.mxu0 0.0
        %1800 = vmatmul.mubr.f32.gmra.mxu0 %v870
        %v1801 = vpop.f32.mrf.mxu0
        %v1802 = vadd.f32 0.0, %v1801
        %v1803 = vpop.f32.mrf.mxu0
        %v1804 = vadd.f32 0.0, %v1803
        %1805 = vmatprep.mubr.f32.mxu0 0.0
        %1806 = vmatmul.mubr.f32.gmra.mxu0 %v873
        %v1807 = vpop.f32.mrf.mxu0
        %v1808 = vadd.f32 0.0, %v1807
        %v1809 = vpop.f32.mrf.mxu0
        %v1810 = vadd.f32 0.0, %v1809
        %1811 = vmatprep.mubr.f32.mxu0 0.0
        %1812 = vmatmul.mubr.f32.gmra.mxu0 %v876
        %v1813 = vpop.f32.mrf.mxu0
        %v1814 = vadd.f32 0.0, %v1813
        %v1815 = vpop.f32.mrf.mxu0
        %v1816 = vadd.f32 0.0, %v1815
        %1817 = vmatprep.mubr.f32.mxu0 0.0
        %1818 = vmatmul.mubr.f32.gmra.mxu0 %v879
        %v1819 = vpop.f32.mrf.mxu0
        %v1820 = vadd.f32 0.0, %v1819
        %v1821 = vpop.f32.mrf.mxu0
        %v1822 = vadd.f32 0.0, %v1821
        %1823 = vmatprep.mubr.f32.mxu0 0.0
        %1824 = vmatmul.mubr.f32.gmra.mxu0 %v882
        %v1825 = vpop.f32.mrf.mxu0
        %v1826 = vadd.f32 0.0, %v1825
        %v1827 = vpop.f32.mrf.mxu0
        %v1828 = vadd.f32 0.0, %v1827
        %1829 = vmatprep.mubr.f32.mxu0 0.0
        %1830 = vmatmul.mubr.f32.gmra.mxu0 %v885
        %v1831 = vpop.f32.mrf.mxu0
        %v1832 = vadd.f32 0.0, %v1831
        %v1833 = vpop.f32.mrf.mxu0
        %v1834 = vadd.f32 0.0, %v1833
        %1835 = vmatprep.mubr.f32.mxu0 0.0
        %1836 = vmatmul.mubr.f32.gmra.mxu0 %v888
        %v1837 = vpop.f32.mrf.mxu0
        %v1838 = vadd.f32 0.0, %v1837
        %v1839 = vpop.f32.mrf.mxu0
        %v1840 = vadd.f32 0.0, %v1839
        %1841 = vmatprep.mubr.f32.mxu0 0.0
        %1842 = vmatmul.mubr.f32.gmra.mxu0 %v891
        %v1843 = vpop.f32.mrf.mxu0
        %v1844 = vadd.f32 0.0, %v1843
        %v1845 = vpop.f32.mrf.mxu0
        %v1846 = vadd.f32 0.0, %v1845
        %1847 = vmatprep.mubr.f32.mxu0 0.0
        %1848 = vmatmul.mubr.f32.gmra.mxu0 %v894
        %v1849 = vpop.f32.mrf.mxu0
        %v1850 = vadd.f32 0.0, %v1849
        %v1851 = vpop.f32.mrf.mxu0
        %v1852 = vadd.f32 0.0, %v1851
        %1853 = vmatprep.mubr.f32.mxu0 0.0
        %1854 = vmatmul.mubr.f32.gmra.mxu0 %v897
        %v1855 = vpop.f32.mrf.mxu0
        %v1856 = vadd.f32 0.0, %v1855
        %v1857 = vpop.f32.mrf.mxu0
        %v1858 = vadd.f32 0.0, %v1857
        %1859 = vmatprep.mubr.f32.mxu0 0.0
        %1860 = vmatmul.mubr.f32.gmra.mxu0 %v900
        %v1861 = vpop.f32.mrf.mxu0
        %v1862 = vadd.f32 0.0, %v1861
        %v1863 = vpop.f32.mrf.mxu0
        %v1864 = vadd.f32 0.0, %v1863
        %1865 = vmatprep.mubr.f32.mxu0 0.0
        %1866 = vmatmul.mubr.f32.gmra.mxu0 %v903
        %v1867 = vpop.f32.mrf.mxu0
        %v1868 = vadd.f32 0.0, %v1867
        %v1869 = vpop.f32.mrf.mxu0
        %v1870 = vadd.f32 0.0, %v1869
        %1871 = vmatprep.mubr.f32.mxu0 0.0
        %1872 = vmatmul.mubr.f32.gmra.mxu0 %v906
        %v1873 = vpop.f32.mrf.mxu0
        %v1874 = vadd.f32 0.0, %v1873
        %v1875 = vpop.f32.mrf.mxu0
        %v1876 = vadd.f32 0.0, %v1875
        %1877 = vmatprep.mubr.f32.mxu0 0.0
        %1878 = vmatmul.mubr.f32.gmra.mxu0 %v909
        %v1879 = vpop.f32.mrf.mxu0
        %v1880 = vadd.f32 0.0, %v1879
        %v1881 = vpop.f32.mrf.mxu0
        %v1882 = vadd.f32 0.0, %v1881
        %1883 = vmatprep.mubr.f32.mxu0 0.0
        %1884 = vmatmul.mubr.f32.gmra.mxu0 %v912
        %v1885 = vpop.f32.mrf.mxu0
        %v1886 = vadd.f32 0.0, %v1885
        %v1887 = vpop.f32.mrf.mxu0
        %v1888 = vadd.f32 0.0, %v1887
        %1889 = vmatprep.mubr.f32.mxu0 0.0
        %1890 = vmatmul.mubr.f32.gmra.mxu0 %v915
        %v1891 = vpop.f32.mrf.mxu0
        %v1892 = vadd.f32 0.0, %v1891
        %v1893 = vpop.f32.mrf.mxu0
        %v1894 = vadd.f32 0.0, %v1893
        %1895 = vmatprep.mubr.f32.mxu0 0.0
        %1896 = vmatmul.mubr.f32.gmra.mxu0 %v918
        %v1897 = vpop.f32.mrf.mxu0
        %v1898 = vadd.f32 0.0, %v1897
        %v1899 = vpop.f32.mrf.mxu0
        %v1900 = vadd.f32 0.0, %v1899
        %1901 = vmatprep.mubr.f32.mxu0 0.0
        %1902 = vmatmul.mubr.f32.gmra.mxu0 %v921
        %v1903 = vpop.f32.mrf.mxu0
        %v1904 = vadd.f32 0.0, %v1903
        %v1905 = vpop.f32.mrf.mxu0
        %v1906 = vadd.f32 0.0, %v1905
        %1907 = vmatprep.mubr.f32.mxu0 0.0
        %1908 = vmatmul.mubr.f32.gmra.mxu0 %v924
        %v1909 = vpop.f32.mrf.mxu0
        %v1910 = vadd.f32 0.0, %v1909
        %v1911 = vpop.f32.mrf.mxu0
        %v1912 = vadd.f32 0.0, %v1911
        %1913 = vmatprep.mubr.f32.mxu0 0.0
        %1914 = vmatmul.mubr.f32.gmra.mxu0 %v927
        %v1915 = vpop.f32.mrf.mxu0
        %v1916 = vadd.f32 0.0, %v1915
        %v1917 = vpop.f32.mrf.mxu0
        %v1918 = vadd.f32 0.0, %v1917
        %1919 = vmatprep.mubr.f32.mxu0 0.0
        %1920 = vmatmul.mubr.f32.gmra.mxu0 %v930
        %v1921 = vpop.f32.mrf.mxu0
        %v1922 = vadd.f32 0.0, %v1921
        %v1923 = vpop.f32.mrf.mxu0
        %v1924 = vadd.f32 0.0, %v1923
        %1925 = vmatprep.mubr.f32.mxu0 0.0
        %1926 = vmatmul.mubr.f32.gmra.mxu0 %v933
        %v1927 = vpop.f32.mrf.mxu0
        %v1928 = vadd.f32 0.0, %v1927
        %v1929 = vpop.f32.mrf.mxu0
        %v1930 = vadd.f32 0.0, %v1929
        %1931 = vmatprep.mubr.f32.mxu0 0.0
        %1932 = vmatmul.mubr.f32.gmra.mxu0 %v936
        %v1933 = vpop.f32.mrf.mxu0
        %v1934 = vadd.f32 0.0, %v1933
        %v1935 = vpop.f32.mrf.mxu0
        %v1936 = vadd.f32 0.0, %v1935
        %1937 = vmatprep.mubr.f32.mxu0 0.0
        %1938 = vmatmul.mubr.f32.gmra.mxu0 %v939
        %v1939 = vpop.f32.mrf.mxu0
        %v1940 = vadd.f32 0.0, %v1939
        %v1941 = vpop.f32.mrf.mxu0
        %v1942 = vadd.f32 0.0, %v1941
        %1943 = vmatprep.mubr.f32.mxu0 0.0
        %1944 = vmatmul.mubr.f32.gmra.mxu0 %v942
        %v1945 = vpop.f32.mrf.mxu0
        %v1946 = vadd.f32 0.0, %v1945
        %v1947 = vpop.f32.mrf.mxu0
        %v1948 = vadd.f32 0.0, %v1947
        %1949 = vmatprep.mubr.f32.mxu0 0.0
        %1950 = vmatmul.mubr.f32.gmra.mxu0 %v945
        %v1951 = vpop.f32.mrf.mxu0
        %v1952 = vadd.f32 0.0, %v1951
        %v1953 = vpop.f32.mrf.mxu0
        %v1954 = vadd.f32 0.0, %v1953
        %1955 = vmatprep.mubr.f32.mxu0 0.0
        %1956 = vmatmul.mubr.f32.gmra.mxu0 %v948
        %v1957 = vpop.f32.mrf.mxu0
        %v1958 = vadd.f32 0.0, %v1957
        %v1959 = vpop.f32.mrf.mxu0
        %v1960 = vadd.f32 0.0, %v1959
        %1961 = vmatprep.mubr.f32.mxu0 0.0
        %1962 = vmatmul.mubr.f32.gmra.mxu0 %v951
        %v1963 = vpop.f32.mrf.mxu0
        %v1964 = vadd.f32 0.0, %v1963
        %v1965 = vpop.f32.mrf.mxu0
        %v1966 = vadd.f32 0.0, %v1965
        %1967 = vmatprep.mubr.f32.mxu0 0.0
        %1968 = vmatmul.mubr.f32.gmra.mxu0 %v954
        %v1969 = vpop.f32.mrf.mxu0
        %v1970 = vadd.f32 0.0, %v1969
        %v1971 = vpop.f32.mrf.mxu0
        %v1972 = vadd.f32 0.0, %v1971
        %1973 = vmatprep.mubr.f32.mxu0 0.0
        %1974 = vmatmul.mubr.f32.gmra.mxu0 %v957
        %v1975 = vpop.f32.mrf.mxu0
        %v1976 = vadd.f32 0.0, %v1975
        %v1977 = vpop.f32.mrf.mxu0
        %v1978 = vadd.f32 0.0, %v1977
        %1979 = vmatprep.mubr.f32.mxu0 0.0
        %1980 = vmatmul.mubr.f32.gmra.mxu0 %v960
        %v1981 = vpop.f32.mrf.mxu0
        %v1982 = vadd.f32 0.0, %v1981
        %v1983 = vpop.f32.mrf.mxu0
        %v1984 = vadd.f32 0.0, %v1983
        %1985 = vmatprep.mubr.f32.mxu0 0.0
        %1986 = vmatmul.mubr.f32.gmra.mxu0 %v963
        %v1987 = vpop.f32.mrf.mxu0
        %v1988 = vadd.f32 0.0, %v1987
        %v1989 = vpop.f32.mrf.mxu0
        %v1990 = vadd.f32 0.0, %v1989
        %1991 = vmatprep.mubr.f32.mxu0 0.0
        %1992 = vmatmul.mubr.f32.gmra.mxu0 %v966
        %v1993 = vpop.f32.mrf.mxu0
        %v1994 = vadd.f32 0.0, %v1993
        %v1995 = vpop.f32.mrf.mxu0
        %v1996 = vadd.f32 0.0, %v1995
        %1997 = vmatprep.mubr.f32.mxu0 0.0
        %1998 = vmatmul.mubr.f32.gmra.mxu0 %v969
        %v1999 = vpop.f32.mrf.mxu0
        %v2000 = vadd.f32 0.0, %v1999
        %v2001 = vpop.f32.mrf.mxu0
        %v2002 = vadd.f32 0.0, %v2001
        %2003 = vmatprep.mubr.f32.mxu0 0.0
        %2004 = vmatmul.mubr.f32.gmra.mxu0 %v972
        %v2005 = vpop.f32.mrf.mxu0
        %v2006 = vadd.f32 0.0, %v2005
        %v2007 = vpop.f32.mrf.mxu0
        %v2008 = vadd.f32 0.0, %v2007
        %2009 = vmatprep.mubr.f32.mxu0 0.0
        %2010 = vmatmul.mubr.f32.gmra.mxu0 %v975
        %v2011 = vpop.f32.mrf.mxu0
        %v2012 = vadd.f32 0.0, %v2011
        %v2013 = vpop.f32.mrf.mxu0
        %v2014 = vadd.f32 0.0, %v2013
        %2015 = vmatprep.mubr.f32.mxu0 0.0
        %2016 = vmatmul.mubr.f32.gmra.mxu0 %v978
        %v2017 = vpop.f32.mrf.mxu0
        %v2018 = vadd.f32 0.0, %v2017
        %v2019 = vpop.f32.mrf.mxu0
        %v2020 = vadd.f32 0.0, %v2019
        %2021 = vmatprep.mubr.f32.mxu0 0.0
        %2022 = vmatmul.mubr.f32.gmra.mxu0 %v981
        %v2023 = vpop.f32.mrf.mxu0
        %v2024 = vadd.f32 0.0, %v2023
        %v2025 = vpop.f32.mrf.mxu0
        %v2026 = vadd.f32 0.0, %v2025
        %2027 = vmatprep.mubr.f32.mxu0 0.0
        %2028 = vmatmul.mubr.f32.gmra.mxu0 %v984
        %v2029 = vpop.f32.mrf.mxu0
        %v2030 = vadd.f32 0.0, %v2029
        %v2031 = vpop.f32.mrf.mxu0
        %v2032 = vadd.f32 0.0, %v2031
        %2033 = vmatprep.mubr.f32.mxu0 0.0
        %2034 = vmatmul.mubr.f32.gmra.mxu0 %v987
        %v2035 = vpop.f32.mrf.mxu0
        %v2036 = vadd.f32 0.0, %v2035
        %v2037 = vpop.f32.mrf.mxu0
        %v2038 = vadd.f32 0.0, %v2037
        %2039 = vmatprep.mubr.f32.mxu0 0.0
        %2040 = vmatmul.mubr.f32.gmra.mxu0 %v990
        %v2041 = vpop.f32.mrf.mxu0
        %v2042 = vadd.f32 0.0, %v2041
        %v2043 = vpop.f32.mrf.mxu0
        %v2044 = vadd.f32 0.0, %v2043
        %2045 = vmatprep.mubr.f32.mxu0 0.0
        %2046 = vmatmul.mubr.f32.gmra.mxu0 %v993
        %v2047 = vpop.f32.mrf.mxu0
        %v2048 = vadd.f32 0.0, %v2047
        %v2049 = vpop.f32.mrf.mxu0
        %v2050 = vadd.f32 0.0, %v2049
        %2051 = vmatprep.mubr.f32.mxu0 0.0
        %2052 = vmatmul.mubr.f32.gmra.mxu0 %v996
        %v2053 = vpop.f32.mrf.mxu0
        %v2054 = vadd.f32 0.0, %v2053
        %v2055 = vpop.f32.mrf.mxu0
        %v2056 = vadd.f32 0.0, %v2055
        %2057 = vmatprep.mubr.f32.mxu0 0.0
        %2058 = vmatmul.mubr.f32.gmra.mxu0 %v999
        %v2059 = vpop.f32.mrf.mxu0
        %v2060 = vadd.f32 0.0, %v2059
        %v2061 = vpop.f32.mrf.mxu0
        %v2062 = vadd.f32 0.0, %v2061
        %2063 = vmatprep.mubr.f32.mxu0 0.0
        %2064 = vmatmul.mubr.f32.gmra.mxu0 %v1002
        %v2065 = vpop.f32.mrf.mxu0
        %v2066 = vadd.f32 0.0, %v2065
        %v2067 = vpop.f32.mrf.mxu0
        %v2068 = vadd.f32 0.0, %v2067
        %2069 = vmatprep.mubr.f32.mxu0 0.0
        %2070 = vmatmul.mubr.f32.gmra.mxu0 %v1005
        %v2071 = vpop.f32.mrf.mxu0
        %v2072 = vadd.f32 0.0, %v2071
        %v2073 = vpop.f32.mrf.mxu0
        %v2074 = vadd.f32 0.0, %v2073
        %2075 = vmatprep.mubr.f32.mxu0 0.0
        %2076 = vmatmul.mubr.f32.gmra.mxu0 %v1008
        %v2077 = vpop.f32.mrf.mxu0
        %v2078 = vadd.f32 0.0, %v2077
        %v2079 = vpop.f32.mrf.mxu0
        %v2080 = vadd.f32 0.0, %v2079
        %2081 = vmatprep.mubr.f32.mxu0 0.0
        %2082 = vmatmul.mubr.f32.gmra.mxu0 %v1011
        %v2083 = vpop.f32.mrf.mxu0
        %v2084 = vadd.f32 0.0, %v2083
        %v2085 = vpop.f32.mrf.mxu0
        %v2086 = vadd.f32 0.0, %v2085
        %2087 = vmatprep.mubr.f32.mxu0 0.0
        %2088 = vmatmul.mubr.f32.gmra.mxu0 %v1014
        %v2089 = vpop.f32.mrf.mxu0
        %v2090 = vadd.f32 0.0, %v2089
        %v2091 = vpop.f32.mrf.mxu0
        %v2092 = vadd.f32 0.0, %v2091
        %2093 = vdwg.mxu0
        %v2094 = vld [vmem:[%s291] sm:$0xff]
        %v2095 = vld [vmem:[%s291 + $0x8] sm:$0xff]
        %v2096 = vld [vmem:[%s291 + $0x10] sm:$0xff]
        %v2097 = vld [vmem:[%s291 + $0x18] sm:$0xff]
        %v2098 = vld [vmem:[%s291 + $0x20] sm:$0xff]
        %v2099 = vld [vmem:[%s291 + $0x28] sm:$0xff]
        %v2100 = vld [vmem:[%s291 + $0x30] sm:$0xff]
        %v2101 = vld [vmem:[%s291 + $0x38] sm:$0xff]
        %v2102 = vld [vmem:[%s291 + $0x40] sm:$0xff]
        %v2103 = vld [vmem:[%s291 + $0x48] sm:$0xff]
        %v2104 = vld [vmem:[%s291 + $0x50] sm:$0xff]
        %v2105 = vld [vmem:[%s291 + $0x58] sm:$0xff]
        %v2106 = vld [vmem:[%s291 + $0x60] sm:$0xff]
        %v2107 = vld [vmem:[%s291 + $0x68] sm:$0xff]
        %v2108 = vld [vmem:[%s291 + $0x70] sm:$0xff]
        %v2109 = vld [vmem:[%s291 + $0x78] sm:$0xff]
        %v2110 = vmul.f32 %v1328, %v2094
        %v2111 = vmul.f32 %v1330, %v2095
        %v2112 = vmul.f32 %v1334, %v2096
        %v2113 = vmul.f32 %v1336, %v2097
        %v2114 = vmul.f32 %v1340, %v2094
        %v2115 = vmul.f32 %v1342, %v2095
        %v2116 = vmul.f32 %v1346, %v2096
        %v2117 = vmul.f32 %v1348, %v2097
        %v2118 = vmul.f32 %v1352, %v2094
        %v2119 = vmul.f32 %v1354, %v2095
        %v2120 = vmul.f32 %v1358, %v2096
        %v2121 = vmul.f32 %v1360, %v2097
        %v2122 = vmul.f32 %v1364, %v2094
        %v2123 = vmul.f32 %v1366, %v2095
        %v2124 = vmul.f32 %v1370, %v2096
        %v2125 = vmul.f32 %v1372, %v2097
        %v2126 = vmul.f32 %v1376, %v2094
        %v2127 = vmul.f32 %v1378, %v2095
        %v2128 = vmul.f32 %v1382, %v2096
        %v2129 = vmul.f32 %v1384, %v2097
        %v2130 = vmul.f32 %v1388, %v2094
        %v2131 = vmul.f32 %v1390, %v2095
        %v2132 = vmul.f32 %v1394, %v2096
        %v2133 = vmul.f32 %v1396, %v2097
        %v2134 = vmul.f32 %v1400, %v2094
        %v2135 = vmul.f32 %v1402, %v2095
        %v2136 = vmul.f32 %v1406, %v2096
        %v2137 = vmul.f32 %v1408, %v2097
        %v2138 = vmul.f32 %v1412, %v2094
        %v2139 = vmul.f32 %v1414, %v2095
        %v2140 = vmul.f32 %v1418, %v2096
        %v2141 = vmul.f32 %v1420, %v2097
        %v2142 = vmul.f32 %v1424, %v2094
        %v2143 = vmul.f32 %v1426, %v2095
        %v2144 = vmul.f32 %v1430, %v2096
        %v2145 = vmul.f32 %v1432, %v2097
        %v2146 = vmul.f32 %v1436, %v2094
        %v2147 = vmul.f32 %v1438, %v2095
        %v2148 = vmul.f32 %v1442, %v2096
        %v2149 = vmul.f32 %v1444, %v2097
        %v2150 = vmul.f32 %v1448, %v2094
        %v2151 = vmul.f32 %v1450, %v2095
        %v2152 = vmul.f32 %v1454, %v2096
        %v2153 = vmul.f32 %v1456, %v2097
        %v2154 = vmul.f32 %v1460, %v2094
        %v2155 = vmul.f32 %v1462, %v2095
        %v2156 = vmul.f32 %v1466, %v2096
        %v2157 = vmul.f32 %v1468, %v2097
        %v2158 = vmul.f32 %v1472, %v2094
        %v2159 = vmul.f32 %v1474, %v2095
        %v2160 = vmul.f32 %v1478, %v2096
        %v2161 = vmul.f32 %v1480, %v2097
        %v2162 = vmul.f32 %v1484, %v2094
        %v2163 = vmul.f32 %v1486, %v2095
        %v2164 = vmul.f32 %v1490, %v2096
        %v2165 = vmul.f32 %v1492, %v2097
        %v2166 = vmul.f32 %v1496, %v2094
        %v2167 = vmul.f32 %v1498, %v2095
        %v2168 = vmul.f32 %v1502, %v2096
        %v2169 = vmul.f32 %v1504, %v2097
        %v2170 = vmul.f32 %v1508, %v2094
        %v2171 = vmul.f32 %v1510, %v2095
        %v2172 = vmul.f32 %v1514, %v2096
        %v2173 = vmul.f32 %v1516, %v2097
        %v2174 = vmul.f32 %v1520, %v2098
        %v2175 = vmul.f32 %v1522, %v2099
        %v2176 = vmul.f32 %v1526, %v2100
        %v2177 = vmul.f32 %v1528, %v2101
        %v2178 = vmul.f32 %v1532, %v2098
        %v2179 = vmul.f32 %v1534, %v2099
        %v2180 = vmul.f32 %v1538, %v2100
        %v2181 = vmul.f32 %v1540, %v2101
        %v2182 = vmul.f32 %v1544, %v2098
        %v2183 = vmul.f32 %v1546, %v2099
        %v2184 = vmul.f32 %v1550, %v2100
        %v2185 = vmul.f32 %v1552, %v2101
        %v2186 = vmul.f32 %v1556, %v2098
        %v2187 = vmul.f32 %v1558, %v2099
        %v2188 = vmul.f32 %v1562, %v2100
        %v2189 = vmul.f32 %v1564, %v2101
        %v2190 = vmul.f32 %v1568, %v2098
        %v2191 = vmul.f32 %v1570, %v2099
        %v2192 = vmul.f32 %v1574, %v2100
        %v2193 = vmul.f32 %v1576, %v2101
        %v2194 = vmul.f32 %v1580, %v2098
        %v2195 = vmul.f32 %v1582, %v2099
        %v2196 = vmul.f32 %v1586, %v2100
        %v2197 = vmul.f32 %v1588, %v2101
        %v2198 = vmul.f32 %v1592, %v2098
        %v2199 = vmul.f32 %v1594, %v2099
        %v2200 = vmul.f32 %v1598, %v2100
        %v2201 = vmul.f32 %v1600, %v2101
        %v2202 = vmul.f32 %v1604, %v2098
        %v2203 = vmul.f32 %v1606, %v2099
        %v2204 = vmul.f32 %v1610, %v2100
        %v2205 = vmul.f32 %v1612, %v2101
        %v2206 = vmul.f32 %v1616, %v2098
        %v2207 = vmul.f32 %v1618, %v2099
        %v2208 = vmul.f32 %v1622, %v2100
        %v2209 = vmul.f32 %v1624, %v2101
        %v2210 = vmul.f32 %v1628, %v2098
        %v2211 = vmul.f32 %v1630, %v2099
        %v2212 = vmul.f32 %v1634, %v2100
        %v2213 = vmul.f32 %v1636, %v2101
        %v2214 = vmul.f32 %v1640, %v2098
        %v2215 = vmul.f32 %v1642, %v2099
        %v2216 = vmul.f32 %v1646, %v2100
        %v2217 = vmul.f32 %v1648, %v2101
        %v2218 = vmul.f32 %v1652, %v2098
        %v2219 = vmul.f32 %v1654, %v2099
        %v2220 = vmul.f32 %v1658, %v2100
        %v2221 = vmul.f32 %v1660, %v2101
        %v2222 = vmul.f32 %v1664, %v2098
        %v2223 = vmul.f32 %v1666, %v2099
        %v2224 = vmul.f32 %v1670, %v2100
        %v2225 = vmul.f32 %v1672, %v2101
        %v2226 = vmul.f32 %v1676, %v2098
        %v2227 = vmul.f32 %v1678, %v2099
        %v2228 = vmul.f32 %v1682, %v2100
        %v2229 = vmul.f32 %v1684, %v2101
        %v2230 = vmul.f32 %v1688, %v2098
        %v2231 = vmul.f32 %v1690, %v2099
        %v2232 = vmul.f32 %v1694, %v2100
        %v2233 = vmul.f32 %v1696, %v2101
        %v2234 = vmul.f32 %v1700, %v2098
        %v2235 = vmul.f32 %v1702, %v2099
        %v2236 = vmul.f32 %v1706, %v2100
        %v2237 = vmul.f32 %v1708, %v2101
        %v2238 = vadd.f32 %v2110, %v2174
        %v2239 = vadd.f32 %v2111, %v2175
        %v2240 = vadd.f32 %v2112, %v2176
        %v2241 = vadd.f32 %v2113, %v2177
        %v2242 = vadd.f32 %v2114, %v2178
        %v2243 = vadd.f32 %v2115, %v2179
        %v2244 = vadd.f32 %v2116, %v2180
        %v2245 = vadd.f32 %v2117, %v2181
        %v2246 = vadd.f32 %v2118, %v2182
        %v2247 = vadd.f32 %v2119, %v2183
        %v2248 = vadd.f32 %v2120, %v2184
        %v2249 = vadd.f32 %v2121, %v2185
        %v2250 = vadd.f32 %v2122, %v2186
        %v2251 = vadd.f32 %v2123, %v2187
        %v2252 = vadd.f32 %v2124, %v2188
        %v2253 = vadd.f32 %v2125, %v2189
        %v2254 = vadd.f32 %v2126, %v2190
        %v2255 = vadd.f32 %v2127, %v2191
        %v2256 = vadd.f32 %v2128, %v2192
        %v2257 = vadd.f32 %v2129, %v2193
        %v2258 = vadd.f32 %v2130, %v2194
        %v2259 = vadd.f32 %v2131, %v2195
        %v2260 = vadd.f32 %v2132, %v2196
        %v2261 = vadd.f32 %v2133, %v2197
        %v2262 = vadd.f32 %v2134, %v2198
        %v2263 = vadd.f32 %v2135, %v2199
        %v2264 = vadd.f32 %v2136, %v2200
        %v2265 = vadd.f32 %v2137, %v2201
        %v2266 = vadd.f32 %v2138, %v2202
        %v2267 = vadd.f32 %v2139, %v2203
        %v2268 = vadd.f32 %v2140, %v2204
        %v2269 = vadd.f32 %v2141, %v2205
        %v2270 = vadd.f32 %v2142, %v2206
        %v2271 = vadd.f32 %v2143, %v2207
        %v2272 = vadd.f32 %v2144, %v2208
        %v2273 = vadd.f32 %v2145, %v2209
        %v2274 = vadd.f32 %v2146, %v2210
        %v2275 = vadd.f32 %v2147, %v2211
        %v2276 = vadd.f32 %v2148, %v2212
        %v2277 = vadd.f32 %v2149, %v2213
        %v2278 = vadd.f32 %v2150, %v2214
        %v2279 = vadd.f32 %v2151, %v2215
        %v2280 = vadd.f32 %v2152, %v2216
        %v2281 = vadd.f32 %v2153, %v2217
        %v2282 = vadd.f32 %v2154, %v2218
        %v2283 = vadd.f32 %v2155, %v2219
        %v2284 = vadd.f32 %v2156, %v2220
        %v2285 = vadd.f32 %v2157, %v2221
        %v2286 = vadd.f32 %v2158, %v2222
        %v2287 = vadd.f32 %v2159, %v2223
        %v2288 = vadd.f32 %v2160, %v2224
        %v2289 = vadd.f32 %v2161, %v2225
        %v2290 = vadd.f32 %v2162, %v2226
        %v2291 = vadd.f32 %v2163, %v2227
        %v2292 = vadd.f32 %v2164, %v2228
        %v2293 = vadd.f32 %v2165, %v2229
        %v2294 = vadd.f32 %v2166, %v2230
        %v2295 = vadd.f32 %v2167, %v2231
        %v2296 = vadd.f32 %v2168, %v2232
        %v2297 = vadd.f32 %v2169, %v2233
        %v2298 = vadd.f32 %v2170, %v2234
        %v2299 = vadd.f32 %v2171, %v2235
        %v2300 = vadd.f32 %v2172, %v2236
        %v2301 = vadd.f32 %v2173, %v2237
        %v2302 = vmul.f32 %v1712, %v2102
        %v2303 = vmul.f32 %v1714, %v2103
        %v2304 = vmul.f32 %v1718, %v2104
        %v2305 = vmul.f32 %v1720, %v2105
        %v2306 = vmul.f32 %v1724, %v2102
        %v2307 = vmul.f32 %v1726, %v2103
        %v2308 = vmul.f32 %v1730, %v2104
        %v2309 = vmul.f32 %v1732, %v2105
        %v2310 = vmul.f32 %v1736, %v2102
        %v2311 = vmul.f32 %v1738, %v2103
        %v2312 = vmul.f32 %v1742, %v2104
        %v2313 = vmul.f32 %v1744, %v2105
        %v2314 = vmul.f32 %v1748, %v2102
        %v2315 = vmul.f32 %v1750, %v2103
        %v2316 = vmul.f32 %v1754, %v2104
        %v2317 = vmul.f32 %v1756, %v2105
        %v2318 = vmul.f32 %v1760, %v2102
        %v2319 = vmul.f32 %v1762, %v2103
        %v2320 = vmul.f32 %v1766, %v2104
        %v2321 = vmul.f32 %v1768, %v2105
        %v2322 = vmul.f32 %v1772, %v2102
        %v2323 = vmul.f32 %v1774, %v2103
        %v2324 = vmul.f32 %v1778, %v2104
        %v2325 = vmul.f32 %v1780, %v2105
        %v2326 = vmul.f32 %v1784, %v2102
        %v2327 = vmul.f32 %v1786, %v2103
        %v2328 = vmul.f32 %v1790, %v2104
        %v2329 = vmul.f32 %v1792, %v2105
        %v2330 = vmul.f32 %v1796, %v2102
        %v2331 = vmul.f32 %v1798, %v2103
        %v2332 = vmul.f32 %v1802, %v2104
        %v2333 = vmul.f32 %v1804, %v2105
        %v2334 = vmul.f32 %v1808, %v2102
        %v2335 = vmul.f32 %v1810, %v2103
        %v2336 = vmul.f32 %v1814, %v2104
        %v2337 = vmul.f32 %v1816, %v2105
        %v2338 = vmul.f32 %v1820, %v2102
        %v2339 = vmul.f32 %v1822, %v2103
        %v2340 = vmul.f32 %v1826, %v2104
        %v2341 = vmul.f32 %v1828, %v2105
        %v2342 = vmul.f32 %v1832, %v2102
        %v2343 = vmul.f32 %v1834, %v2103
        %v2344 = vmul.f32 %v1838, %v2104
        %v2345 = vmul.f32 %v1840, %v2105
        %v2346 = vmul.f32 %v1844, %v2102
        %v2347 = vmul.f32 %v1846, %v2103
        %v2348 = vmul.f32 %v1850, %v2104
        %v2349 = vmul.f32 %v1852, %v2105
        %v2350 = vmul.f32 %v1856, %v2102
        %v2351 = vmul.f32 %v1858, %v2103
        %v2352 = vmul.f32 %v1862, %v2104
        %v2353 = vmul.f32 %v1864, %v2105
        %v2354 = vmul.f32 %v1868, %v2102
        %v2355 = vmul.f32 %v1870, %v2103
        %v2356 = vmul.f32 %v1874, %v2104
        %v2357 = vmul.f32 %v1876, %v2105
        %v2358 = vmul.f32 %v1880, %v2102
        %v2359 = vmul.f32 %v1882, %v2103
        %v2360 = vmul.f32 %v1886, %v2104
        %v2361 = vmul.f32 %v1888, %v2105
        %v2362 = vmul.f32 %v1892, %v2102
        %v2363 = vmul.f32 %v1894, %v2103
        %v2364 = vmul.f32 %v1898, %v2104
        %v2365 = vmul.f32 %v1900, %v2105
        %v2366 = vadd.f32 %v2238, %v2302
        %v2367 = vadd.f32 %v2239, %v2303
        %v2368 = vadd.f32 %v2240, %v2304
        %v2369 = vadd.f32 %v2241, %v2305
        %v2370 = vadd.f32 %v2242, %v2306
        %v2371 = vadd.f32 %v2243, %v2307
        %v2372 = vadd.f32 %v2244, %v2308
        %v2373 = vadd.f32 %v2245, %v2309
        %v2374 = vadd.f32 %v2246, %v2310
        %v2375 = vadd.f32 %v2247, %v2311
        %v2376 = vadd.f32 %v2248, %v2312
        %v2377 = vadd.f32 %v2249, %v2313
        %v2378 = vadd.f32 %v2250, %v2314
        %v2379 = vadd.f32 %v2251, %v2315
        %v2380 = vadd.f32 %v2252, %v2316
        %v2381 = vadd.f32 %v2253, %v2317
        %v2382 = vadd.f32 %v2254, %v2318
        %v2383 = vadd.f32 %v2255, %v2319
        %v2384 = vadd.f32 %v2256, %v2320
        %v2385 = vadd.f32 %v2257, %v2321
        %v2386 = vadd.f32 %v2258, %v2322
        %v2387 = vadd.f32 %v2259, %v2323
        %v2388 = vadd.f32 %v2260, %v2324
        %v2389 = vadd.f32 %v2261, %v2325
        %v2390 = vadd.f32 %v2262, %v2326
        %v2391 = vadd.f32 %v2263, %v2327
        %v2392 = vadd.f32 %v2264, %v2328
        %v2393 = vadd.f32 %v2265, %v2329
        %v2394 = vadd.f32 %v2266, %v2330
        %v2395 = vadd.f32 %v2267, %v2331
        %v2396 = vadd.f32 %v2268, %v2332
        %v2397 = vadd.f32 %v2269, %v2333
        %v2398 = vadd.f32 %v2270, %v2334
        %v2399 = vadd.f32 %v2271, %v2335
        %v2400 = vadd.f32 %v2272, %v2336
        %v2401 = vadd.f32 %v2273, %v2337
        %v2402 = vadd.f32 %v2274, %v2338
        %v2403 = vadd.f32 %v2275, %v2339
        %v2404 = vadd.f32 %v2276, %v2340
        %v2405 = vadd.f32 %v2277, %v2341
        %v2406 = vadd.f32 %v2278, %v2342
        %v2407 = vadd.f32 %v2279, %v2343
        %v2408 = vadd.f32 %v2280, %v2344
        %v2409 = vadd.f32 %v2281, %v2345
        %v2410 = vadd.f32 %v2282, %v2346
        %v2411 = vadd.f32 %v2283, %v2347
        %v2412 = vadd.f32 %v2284, %v2348
        %v2413 = vadd.f32 %v2285, %v2349
        %v2414 = vadd.f32 %v2286, %v2350
        %v2415 = vadd.f32 %v2287, %v2351
        %v2416 = vadd.f32 %v2288, %v2352
        %v2417 = vadd.f32 %v2289, %v2353
        %v2418 = vadd.f32 %v2290, %v2354
        %v2419 = vadd.f32 %v2291, %v2355
        %v2420 = vadd.f32 %v2292, %v2356
        %v2421 = vadd.f32 %v2293, %v2357
        %v2422 = vadd.f32 %v2294, %v2358
        %v2423 = vadd.f32 %v2295, %v2359
        %v2424 = vadd.f32 %v2296, %v2360
        %v2425 = vadd.f32 %v2297, %v2361
        %v2426 = vadd.f32 %v2298, %v2362
        %v2427 = vadd.f32 %v2299, %v2363
        %v2428 = vadd.f32 %v2300, %v2364
        %v2429 = vadd.f32 %v2301, %v2365
        %v2430 = vmul.f32 %v1904, %v2106
        %v2431 = vmul.f32 %v1906, %v2107
        %v2432 = vmul.f32 %v1910, %v2108
        %v2433 = vmul.f32 %v1912, %v2109
        %v2434 = vmul.f32 %v1916, %v2106
        %v2435 = vmul.f32 %v1918, %v2107
        %v2436 = vmul.f32 %v1922, %v2108
        %v2437 = vmul.f32 %v1924, %v2109
        %v2438 = vmul.f32 %v1928, %v2106
        %v2439 = vmul.f32 %v1930, %v2107
        %v2440 = vmul.f32 %v1934, %v2108
        %v2441 = vmul.f32 %v1936, %v2109
        %v2442 = vmul.f32 %v1940, %v2106
        %v2443 = vmul.f32 %v1942, %v2107
        %v2444 = vmul.f32 %v1946, %v2108
        %v2445 = vmul.f32 %v1948, %v2109
        %v2446 = vmul.f32 %v1952, %v2106
        %v2447 = vmul.f32 %v1954, %v2107
        %v2448 = vmul.f32 %v1958, %v2108
        %v2449 = vmul.f32 %v1960, %v2109
        %v2450 = vmul.f32 %v1964, %v2106
        %v2451 = vmul.f32 %v1966, %v2107
        %v2452 = vmul.f32 %v1970, %v2108
        %v2453 = vmul.f32 %v1972, %v2109
        %v2454 = vmul.f32 %v1976, %v2106
        %v2455 = vmul.f32 %v1978, %v2107
        %v2456 = vmul.f32 %v1982, %v2108
        %v2457 = vmul.f32 %v1984, %v2109
        %v2458 = vmul.f32 %v1988, %v2106
        %v2459 = vmul.f32 %v1990, %v2107
        %v2460 = vmul.f32 %v1994, %v2108
        %v2461 = vmul.f32 %v1996, %v2109
        %v2462 = vmul.f32 %v2000, %v2106
        %v2463 = vmul.f32 %v2002, %v2107
        %v2464 = vmul.f32 %v2006, %v2108
        %v2465 = vmul.f32 %v2008, %v2109
        %v2466 = vmul.f32 %v2012, %v2106
        %v2467 = vmul.f32 %v2014, %v2107
        %v2468 = vmul.f32 %v2018, %v2108
        %v2469 = vmul.f32 %v2020, %v2109
        %v2470 = vmul.f32 %v2024, %v2106
        %v2471 = vmul.f32 %v2026, %v2107
        %v2472 = vmul.f32 %v2030, %v2108
        %v2473 = vmul.f32 %v2032, %v2109
        %v2474 = vmul.f32 %v2036, %v2106
        %v2475 = vmul.f32 %v2038, %v2107
        %v2476 = vmul.f32 %v2042, %v2108
        %v2477 = vmul.f32 %v2044, %v2109
        %v2478 = vmul.f32 %v2048, %v2106
        %v2479 = vmul.f32 %v2050, %v2107
        %v2480 = vmul.f32 %v2054, %v2108
        %v2481 = vmul.f32 %v2056, %v2109
        %v2482 = vmul.f32 %v2060, %v2106
        %v2483 = vmul.f32 %v2062, %v2107
        %v2484 = vmul.f32 %v2066, %v2108
        %v2485 = vmul.f32 %v2068, %v2109
        %v2486 = vmul.f32 %v2072, %v2106
        %v2487 = vmul.f32 %v2074, %v2107
        %v2488 = vmul.f32 %v2078, %v2108
        %v2489 = vmul.f32 %v2080, %v2109
        %v2490 = vmul.f32 %v2084, %v2106
        %v2491 = vmul.f32 %v2086, %v2107
        %v2492 = vmul.f32 %v2090, %v2108
        %v2493 = vmul.f32 %v2092, %v2109
        %v2494 = vadd.f32 %v2366, %v2430
        %v2495 = vadd.f32 %v2367, %v2431
        %v2496 = vadd.f32 %v2368, %v2432
        %v2497 = vadd.f32 %v2369, %v2433
        %v2498 = vadd.f32 %v2370, %v2434
        %v2499 = vadd.f32 %v2371, %v2435
        %v2500 = vadd.f32 %v2372, %v2436
        %v2501 = vadd.f32 %v2373, %v2437
        %v2502 = vadd.f32 %v2374, %v2438
        %v2503 = vadd.f32 %v2375, %v2439
        %v2504 = vadd.f32 %v2376, %v2440
        %v2505 = vadd.f32 %v2377, %v2441
        %v2506 = vadd.f32 %v2378, %v2442
        %v2507 = vadd.f32 %v2379, %v2443
        %v2508 = vadd.f32 %v2380, %v2444
        %v2509 = vadd.f32 %v2381, %v2445
        %v2510 = vadd.f32 %v2382, %v2446
        %v2511 = vadd.f32 %v2383, %v2447
        %v2512 = vadd.f32 %v2384, %v2448
        %v2513 = vadd.f32 %v2385, %v2449
        %v2514 = vadd.f32 %v2386, %v2450
        %v2515 = vadd.f32 %v2387, %v2451
        %v2516 = vadd.f32 %v2388, %v2452
        %v2517 = vadd.f32 %v2389, %v2453
        %v2518 = vadd.f32 %v2390, %v2454
        %v2519 = vadd.f32 %v2391, %v2455
        %v2520 = vadd.f32 %v2392, %v2456
        %v2521 = vadd.f32 %v2393, %v2457
        %v2522 = vadd.f32 %v2394, %v2458
        %v2523 = vadd.f32 %v2395, %v2459
        %v2524 = vadd.f32 %v2396, %v2460
        %v2525 = vadd.f32 %v2397, %v2461
        %v2526 = vadd.f32 %v2398, %v2462
        %v2527 = vadd.f32 %v2399, %v2463
        %v2528 = vadd.f32 %v2400, %v2464
        %v2529 = vadd.f32 %v2401, %v2465
        %v2530 = vadd.f32 %v2402, %v2466
        %v2531 = vadd.f32 %v2403, %v2467
        %v2532 = vadd.f32 %v2404, %v2468
        %v2533 = vadd.f32 %v2405, %v2469
        %v2534 = vadd.f32 %v2406, %v2470
        %v2535 = vadd.f32 %v2407, %v2471
        %v2536 = vadd.f32 %v2408, %v2472
        %v2537 = vadd.f32 %v2409, %v2473
        %v2538 = vadd.f32 %v2410, %v2474
        %v2539 = vadd.f32 %v2411, %v2475
        %v2540 = vadd.f32 %v2412, %v2476
        %v2541 = vadd.f32 %v2413, %v2477
        %v2542 = vadd.f32 %v2414, %v2478
        %v2543 = vadd.f32 %v2415, %v2479
        %v2544 = vadd.f32 %v2416, %v2480
        %v2545 = vadd.f32 %v2417, %v2481
        %v2546 = vadd.f32 %v2418, %v2482
        %v2547 = vadd.f32 %v2419, %v2483
        %v2548 = vadd.f32 %v2420, %v2484
        %v2549 = vadd.f32 %v2421, %v2485
        %v2550 = vadd.f32 %v2422, %v2486
        %v2551 = vadd.f32 %v2423, %v2487
        %v2552 = vadd.f32 %v2424, %v2488
        %v2553 = vadd.f32 %v2425, %v2489
        %v2554 = vadd.f32 %v2426, %v2490
        %v2555 = vadd.f32 %v2427, %v2491
        %v2556 = vadd.f32 %v2428, %v2492
        %v2557 = vadd.f32 %v2429, %v2493
        %v2558 = vadd.f32 %v1136, %v2494
        %v2559 = vadd.f32 %v1138, %v2495
        %v2560 = vadd.f32 %v1142, %v2496
        %v2561 = vadd.f32 %v1144, %v2497
        %v2562 = vadd.f32 %v1148, %v2498
        %v2563 = vadd.f32 %v1150, %v2499
        %v2564 = vadd.f32 %v1154, %v2500
        %v2565 = vadd.f32 %v1156, %v2501
        %v2566 = vadd.f32 %v1160, %v2502
        %v2567 = vadd.f32 %v1162, %v2503
        %v2568 = vadd.f32 %v1166, %v2504
        %v2569 = vadd.f32 %v1168, %v2505
        %v2570 = vadd.f32 %v1172, %v2506
        %v2571 = vadd.f32 %v1174, %v2507
        %v2572 = vadd.f32 %v1178, %v2508
        %v2573 = vadd.f32 %v1180, %v2509
        %v2574 = vadd.f32 %v1184, %v2510
        %v2575 = vadd.f32 %v1186, %v2511
        %v2576 = vadd.f32 %v1190, %v2512
        %v2577 = vadd.f32 %v1192, %v2513
        %v2578 = vadd.f32 %v1196, %v2514
        %v2579 = vadd.f32 %v1198, %v2515
        %v2580 = vadd.f32 %v1202, %v2516
        %v2581 = vadd.f32 %v1204, %v2517
        %v2582 = vadd.f32 %v1208, %v2518
        %v2583 = vadd.f32 %v1210, %v2519
        %v2584 = vadd.f32 %v1214, %v2520
        %v2585 = vadd.f32 %v1216, %v2521
        %v2586 = vadd.f32 %v1220, %v2522
        %v2587 = vadd.f32 %v1222, %v2523
        %v2588 = vadd.f32 %v1226, %v2524
        %v2589 = vadd.f32 %v1228, %v2525
        %v2590 = vadd.f32 %v1232, %v2526
        %v2591 = vadd.f32 %v1234, %v2527
        %v2592 = vadd.f32 %v1238, %v2528
        %v2593 = vadd.f32 %v1240, %v2529
        %v2594 = vadd.f32 %v1244, %v2530
        %v2595 = vadd.f32 %v1246, %v2531
        %v2596 = vadd.f32 %v1250, %v2532
        %v2597 = vadd.f32 %v1252, %v2533
        %v2598 = vadd.f32 %v1256, %v2534
        %v2599 = vadd.f32 %v1258, %v2535
        %v2600 = vadd.f32 %v1262, %v2536
        %v2601 = vadd.f32 %v1264, %v2537
        %v2602 = vadd.f32 %v1268, %v2538
        %v2603 = vadd.f32 %v1270, %v2539
        %v2604 = vadd.f32 %v1274, %v2540
        %v2605 = vadd.f32 %v1276, %v2541
        %v2606 = vadd.f32 %v1280, %v2542
        %v2607 = vadd.f32 %v1282, %v2543
        %v2608 = vadd.f32 %v1286, %v2544
        %v2609 = vadd.f32 %v1288, %v2545
        %v2610 = vadd.f32 %v1292, %v2546
        %v2611 = vadd.f32 %v1294, %v2547
        %v2612 = vadd.f32 %v1298, %v2548
        %v2613 = vadd.f32 %v1300, %v2549
        %v2614 = vadd.f32 %v1304, %v2550
        %v2615 = vadd.f32 %v1306, %v2551
        %v2616 = vadd.f32 %v1310, %v2552
        %v2617 = vadd.f32 %v1312, %v2553
        %v2618 = vadd.f32 %v1316, %v2554
        %v2619 = vadd.f32 %v1318, %v2555
        %v2620 = vadd.f32 %v1322, %v2556
        %v2621 = vadd.f32 %v1324, %v2557
        %v2622 = vmul.f32 %v2558, %v2094
        %v2623 = vmul.f32 %v2559, %v2095
        %v2624 = vmul.f32 %v2560, %v2096
        %v2625 = vmul.f32 %v2561, %v2097
        %v2626 = vmul.f32 %v2562, %v2094
        %v2627 = vmul.f32 %v2563, %v2095
        %v2628 = vmul.f32 %v2564, %v2096
        %v2629 = vmul.f32 %v2565, %v2097
        %v2630 = vmul.f32 %v2566, %v2094
        %v2631 = vmul.f32 %v2567, %v2095
        %v2632 = vmul.f32 %v2568, %v2096
        %v2633 = vmul.f32 %v2569, %v2097
        %v2634 = vmul.f32 %v2570, %v2094
        %v2635 = vmul.f32 %v2571, %v2095
        %v2636 = vmul.f32 %v2572, %v2096
        %v2637 = vmul.f32 %v2573, %v2097
        %v2638 = vmul.f32 %v2574, %v2098
        %v2639 = vmul.f32 %v2575, %v2099
        %v2640 = vmul.f32 %v2576, %v2100
        %v2641 = vmul.f32 %v2577, %v2101
        %v2642 = vmul.f32 %v2578, %v2098
        %v2643 = vmul.f32 %v2579, %v2099
        %v2644 = vmul.f32 %v2580, %v2100
        %v2645 = vmul.f32 %v2581, %v2101
        %v2646 = vmul.f32 %v2582, %v2098
        %v2647 = vmul.f32 %v2583, %v2099
        %v2648 = vmul.f32 %v2584, %v2100
        %v2649 = vmul.f32 %v2585, %v2101
        %v2650 = vmul.f32 %v2586, %v2098
        %v2651 = vmul.f32 %v2587, %v2099
        %v2652 = vmul.f32 %v2588, %v2100
        %v2653 = vmul.f32 %v2589, %v2101
        %v2654 = vadd.f32 %v2622, %v2638
        %v2655 = vadd.f32 %v2623, %v2639
        %v2656 = vadd.f32 %v2624, %v2640
        %v2657 = vadd.f32 %v2625, %v2641
        %v2658 = vadd.f32 %v2626, %v2642
        %v2659 = vadd.f32 %v2627, %v2643
        %v2660 = vadd.f32 %v2628, %v2644
        %v2661 = vadd.f32 %v2629, %v2645
        %v2662 = vadd.f32 %v2630, %v2646
        %v2663 = vadd.f32 %v2631, %v2647
        %v2664 = vadd.f32 %v2632, %v2648
        %v2665 = vadd.f32 %v2633, %v2649
        %v2666 = vadd.f32 %v2634, %v2650
        %v2667 = vadd.f32 %v2635, %v2651
        %v2668 = vadd.f32 %v2636, %v2652
        %v2669 = vadd.f32 %v2637, %v2653
        %v2670 = vmul.f32 %v2590, %v2102
        %v2671 = vmul.f32 %v2591, %v2103
        %v2672 = vmul.f32 %v2592, %v2104
        %v2673 = vmul.f32 %v2593, %v2105
        %v2674 = vmul.f32 %v2594, %v2102
        %v2675 = vmul.f32 %v2595, %v2103
        %v2676 = vmul.f32 %v2596, %v2104
        %v2677 = vmul.f32 %v2597, %v2105
        %v2678 = vmul.f32 %v2598, %v2102
        %v2679 = vmul.f32 %v2599, %v2103
        %v2680 = vmul.f32 %v2600, %v2104
        %v2681 = vmul.f32 %v2601, %v2105
        %v2682 = vmul.f32 %v2602, %v2102
        %v2683 = vmul.f32 %v2603, %v2103
        %v2684 = vmul.f32 %v2604, %v2104
        %v2685 = vmul.f32 %v2605, %v2105
        %v2686 = vadd.f32 %v2654, %v2670
        %v2687 = vadd.f32 %v2655, %v2671
        %v2688 = vadd.f32 %v2656, %v2672
        %v2689 = vadd.f32 %v2657, %v2673
        %v2690 = vadd.f32 %v2658, %v2674
        %v2691 = vadd.f32 %v2659, %v2675
        %v2692 = vadd.f32 %v2660, %v2676
        %v2693 = vadd.f32 %v2661, %v2677
        %v2694 = vadd.f32 %v2662, %v2678
        %v2695 = vadd.f32 %v2663, %v2679
        %v2696 = vadd.f32 %v2664, %v2680
        %v2697 = vadd.f32 %v2665, %v2681
        %v2698 = vadd.f32 %v2666, %v2682
        %v2699 = vadd.f32 %v2667, %v2683
        %v2700 = vadd.f32 %v2668, %v2684
        %v2701 = vadd.f32 %v2669, %v2685
        %v2702 = vmul.f32 %v2606, %v2106
        %v2703 = vmul.f32 %v2607, %v2107
        %v2704 = vmul.f32 %v2608, %v2108
        %v2705 = vmul.f32 %v2609, %v2109
        %v2706 = vmul.f32 %v2610, %v2106
        %v2707 = vmul.f32 %v2611, %v2107
        %v2708 = vmul.f32 %v2612, %v2108
        %v2709 = vmul.f32 %v2613, %v2109
        %v2710 = vmul.f32 %v2614, %v2106
        %v2711 = vmul.f32 %v2615, %v2107
        %v2712 = vmul.f32 %v2616, %v2108
        %v2713 = vmul.f32 %v2617, %v2109
        %v2714 = vmul.f32 %v2618, %v2106
        %v2715 = vmul.f32 %v2619, %v2107
        %v2716 = vmul.f32 %v2620, %v2108
        %v2717 = vmul.f32 %v2621, %v2109
        %v2718 = vadd.f32 %v2686, %v2702
        %v2719 = vadd.f32 %v2687, %v2703
        %v2720 = vadd.f32 %v2688, %v2704
        %v2721 = vadd.f32 %v2689, %v2705
        %v2722 = vadd.f32 %v2690, %v2706
        %v2723 = vadd.f32 %v2691, %v2707
        %v2724 = vadd.f32 %v2692, %v2708
        %v2725 = vadd.f32 %v2693, %v2709
        %v2726 = vadd.f32 %v2694, %v2710
        %v2727 = vadd.f32 %v2695, %v2711
        %v2728 = vadd.f32 %v2696, %v2712
        %v2729 = vadd.f32 %v2697, %v2713
        %v2730 = vadd.f32 %v2698, %v2714
        %v2731 = vadd.f32 %v2699, %v2715
        %v2732 = vadd.f32 %v2700, %v2716
        %v2733 = vadd.f32 %v2701, %v2717
        %v2734 = vadd.f32 %v1088, %v2718
        %v2735 = vadd.f32 %v1090, %v2719
        %v2736 = vadd.f32 %v1094, %v2720
        %v2737 = vadd.f32 %v1096, %v2721
        %v2738 = vadd.f32 %v1100, %v2722
        %v2739 = vadd.f32 %v1102, %v2723
        %v2740 = vadd.f32 %v1106, %v2724
        %v2741 = vadd.f32 %v1108, %v2725
        %v2742 = vadd.f32 %v1112, %v2726
        %v2743 = vadd.f32 %v1114, %v2727
        %v2744 = vadd.f32 %v1118, %v2728
        %v2745 = vadd.f32 %v1120, %v2729
        %v2746 = vadd.f32 %v1124, %v2730
        %v2747 = vadd.f32 %v1126, %v2731
        %v2748 = vadd.f32 %v1130, %v2732
        %v2749 = vadd.f32 %v1132, %v2733
        %v2750 = vmul.f32 %v2734, %v2094
        %v2751 = vmul.f32 %v2735, %v2095
        %v2752 = vmul.f32 %v2736, %v2096
        %v2753 = vmul.f32 %v2737, %v2097
        %v2754 = vmul.f32 %v2738, %v2098
        %v2755 = vmul.f32 %v2739, %v2099
        %v2756 = vmul.f32 %v2740, %v2100
        %v2757 = vmul.f32 %v2741, %v2101
        %v2758 = vadd.f32 %v2750, %v2754
        %v2759 = vadd.f32 %v2751, %v2755
        %v2760 = vadd.f32 %v2752, %v2756
        %v2761 = vadd.f32 %v2753, %v2757
        %v2762 = vmul.f32 %v2742, %v2102
        %v2763 = vmul.f32 %v2743, %v2103
        %v2764 = vmul.f32 %v2744, %v2104
        %v2765 = vmul.f32 %v2745, %v2105
        %v2766 = vadd.f32 %v2758, %v2762
        %v2767 = vadd.f32 %v2759, %v2763
        %v2768 = vadd.f32 %v2760, %v2764
        %v2769 = vadd.f32 %v2761, %v2765
        %v2770 = vmul.f32 %v2746, %v2106
        %v2771 = vmul.f32 %v2747, %v2107
        %v2772 = vmul.f32 %v2748, %v2108
        %v2773 = vmul.f32 %v2749, %v2109
        %v2774 = vadd.f32 %v2766, %v2770
        %v2775 = vadd.f32 %v2767, %v2771
        %v2776 = vadd.f32 %v2768, %v2772
        %v2777 = vadd.f32 %v2769, %v2773
        %v2778 = vld [vmem:[%s4] sm:$0xff]
        %v2779 = vld [vmem:[%s4 + $0x8] sm:$0xff]
        %v2780 = vld [vmem:[%s298] sm:$0xff]
        %v2781 = vld [vmem:[%s298 + $0x8] sm:$0xff]
        %v2782 = vld [vmem:[%s298 + $0x10] sm:$0xff]
        %v2783 = vld [vmem:[%s298 + $0x18] sm:$0xff]
        %vm2784 = vcmask 130048
        %v2786 = vsel %vm2784, %v2778, 0
        %v2789 = vsel %vm2784, %v2779, 0
        %2791 = vmatprep.subr.mxu0 0.0
        %2792 = vmatpush1.msra.mxu0 0.0
        %2793 = vmatprep.subr.mxu0 0.0
        %2794 = vmatpush1.msra.mxu0 0.0
        %2795 = vmatprep.subr.mxu0 0.0
        %2796 = vmatpush1.msra.mxu0 0.0
        %2797 = vmatprep.subr.mxu0 0.0
        %2798 = vmatpush1.msra.mxu0 0.0
        %2799 = vmatprep.subr.mxu0 0.0
        %2800 = vmatpush1.msra.mxu0 0.0
        %2801 = vmatprep.subr.mxu0 0.0
        %2802 = vmatpush1.msra.mxu0 0.0
        %2803 = vmatprep.subr.mxu0 0.0
        %2804 = vmatpush1.msra.mxu0 0.0
        %2805 = vmatprep.subr.mxu0 0.0
        %2806 = vmatpush1.msra.mxu0 0.0
        %2807 = vmatprep.subr.mxu0 0.0
        %2808 = vmatpush1.msra.mxu0 0.0
        %2809 = vmatprep.subr.mxu0 0.0
        %2810 = vmatpush1.msra.mxu0 0.0
        %2811 = vmatprep.subr.mxu0 0.0
        %2812 = vmatpush1.msra.mxu0 0.0
        %2813 = vmatprep.subr.mxu0 0.0
        %2814 = vmatpush1.msra.mxu0 0.0
        %2815 = vmatprep.subr.mxu0 0.0
        %2816 = vmatpush1.msra.mxu0 0.0
        %2817 = vmatprep.subr.mxu0 0.0
        %2818 = vmatpush1.msra.mxu0 0.0
        %2819 = vmatprep.subr.mxu0 %v2777
        %2820 = vmatpush1.msra.mxu0 %v2776
        %2821 = vmatprep.subr.mxu0 %v2775
        %2822 = vmatpush1.msra.mxu0 %v2774
        %2823 = vmatprep.subr.mxu0 0.0
        %2824 = vmatpush2.msra.mxu0 0.0
        %2825 = vmatprep.subr.mxu0 0.0
        %2826 = vmatpush2.msra.mxu0 0.0
        %2827 = vmatprep.subr.mxu0 0.0
        %2828 = vmatpush2.msra.mxu0 0.0
        %2829 = vmatprep.subr.mxu0 0.0
        %2830 = vmatpush2.msra.mxu0 0.0
        %2831 = vmatprep.subr.mxu0 0.0
        %2832 = vmatpush2.msra.mxu0 0.0
        %2833 = vmatprep.subr.mxu0 0.0
        %2834 = vmatpush2.msra.mxu0 0.0
        %2835 = vmatprep.subr.mxu0 0.0
        %2836 = vmatpush2.msra.mxu0 0.0
        %2837 = vmatprep.subr.mxu0 0.0
        %2838 = vmatpush2.msra.mxu0 0.0
        %2839 = vmatprep.subr.mxu0 0.0
        %2840 = vmatpush2.msra.mxu0 0.0
        %2841 = vmatprep.subr.mxu0 0.0
        %2842 = vmatpush2.msra.mxu0 0.0
        %2843 = vmatprep.subr.mxu0 0.0
        %2844 = vmatpush2.msra.mxu0 0.0
        %2845 = vmatprep.subr.mxu0 0.0
        %2846 = vmatpush2.msra.mxu0 0.0
        %2847 = vmatprep.subr.mxu0 0.0
        %2848 = vmatpush2.msra.mxu0 0.0
        %2849 = vmatprep.subr.mxu0 0.0
        %2850 = vmatpush2.msra.mxu0 0.0
        %2851 = vmatprep.subr.mxu0 0.0
        %2852 = vmatpush2.msra.mxu0 0.0
        %2853 = vmatprep.subr.mxu0 0.0
        %2854 = vmatpush2.msra.mxu0 0.0
        %2855 = vmatprep.mubr.f32.mxu0 0.0
        %2856 = vmatmul.mubr.f32.gmra.mxu0 %v2786
        %v2857 = vpop.f32.mrf.mxu0
        %v2858 = vadd.f32 %v2780, %v2857
        %v2859 = vpop.f32.mrf.mxu0
        %v2860 = vadd.f32 %v2781, %v2859
        %2861 = vmatprep.mubr.f32.mxu0 0.0
        %2862 = vmatmul.mubr.f32.gmra.mxu0 %v2789
        %v2863 = vpop.f32.mrf.mxu0
        %v2864 = vadd.f32 %v2782, %v2863
        %v2865 = vpop.f32.mrf.mxu0
        %v2866 = vadd.f32 %v2783, %v2865
        %2867 = vdwg.mxu0
        %2868 = vst [vmem:[%s330] sm:$0xff] %v2858
        %2869 = vst [vmem:[%s330 + $0x8] sm:$0xff] %v2860
        %2870 = vst [vmem:[%s330 + $0x10] sm:$0xff] %v2864
        %2871 = vst [vmem:[%s330 + $0x18] sm:$0xff] %v2866
        %s2872 = sand.u32 %s144, 1
        %s2873 = sand.u32 %s144, 1
        %s2874 = smul.addr %s2873, 32
        %s2875 = scalar_lea.vmem [#allocation4], %s2874
        // Predicated region
        $region87: #{equivariant_product_basis_block.1} parent=77 // pred_check
          %p2876 = pneg %p154
        $region88: #{equivariant_product_basis_block.1} parent=77 // pred_check_branch
          %2878 = sbr.rel (%p2876) target = $region90
        $region89: #{equivariant_product_basis_block.1} parent=77 // pred_region
          %s2879 = smul.u32 2, %s16
          %s2880 = smul.addr %s2879, 8
          %s2881 = scalar_lea.vmem %s5, %s2880
          // Predicated region
          $region91: #{equivariant_product_basis_block.1} parent=89 // pred_check
            _
          $region92: #{equivariant_product_basis_block.1} parent=89 // pred_check_branch
            %2883 = sbr.rel (0) target = $region94
          $region93: #{equivariant_product_basis_block.1} parent=89 // pred_region
            // Predicated region
            $region95: #{equivariant_product_basis_block.1} parent=93 // pred_check
              _
            $region96: #{equivariant_product_basis_block.1} parent=93 // pred_check_branch
              %2885 = sbr.rel (0) target = $region98
            $region97: #{equivariant_product_basis_block.1} parent=93 // pred_region
              loop: start=0, step=1, limit=1
              $region99: #{equivariant_product_basis_block.1} parent=97 // loop_pre_header
                _
              $region100: #{equivariant_product_basis_block.1} parent=97 // loop_header
                %s2887 = sphi 0, %s2891
                %p2888 = scmp.ge.s32.totalorder %s2887, 1
                %s2892 = sphi %s2875, %s2875
                %s2893 = sphi %s2881, %s2881
              $region101: #{equivariant_product_basis_block.1} parent=97 // loop_header_branch
                %2890 = sbr.rel (%p2888) target = $region105
              $region102: #{equivariant_product_basis_block.1} parent=97 // loop_body
                %v2894 = vld [vmem:[%s2892] sm:$0xff]
                %2895 = vst [vmem:[%s2893] sm:$0xff] %v2894
                %v2896 = vld [vmem:[%s2892 + $0x8] sm:$0xff]
                %2897 = vst [vmem:[%s2893 + $0x8] sm:$0xff] %v2896
                %v2898 = vld [vmem:[%s2892 + $0x10] sm:$0xff]
                %2899 = vst [vmem:[%s2893 + $0x20] sm:$0xff] %v2898
                %v2900 = vld [vmem:[%s2892 + $0x18] sm:$0xff]
                %2901 = vst [vmem:[%s2893 + $0x28] sm:$0xff] %v2900
              $region103: #{equivariant_product_basis_block.1} parent=97 // loop_footer
                %s2891 = sadd.s32 1, %s2887
              $region104: #{equivariant_product_basis_block.1} parent=97 // loop_footer_branch
                %2886 = sbr.rel target = $region100
              $region105: #{equivariant_product_basis_block.1} parent=97 // loop_exit
                _
            $region98: #{equivariant_product_basis_block.1} parent=93 // pred_fallthru
              _
            // Predicated region
            $region106: #{equivariant_product_basis_block.1} parent=93 // pred_check
              _
            $region107: #{equivariant_product_basis_block.1} parent=93 // pred_check_branch
              %2903 = sbr.rel target = $region109
            $region108: #{equivariant_product_basis_block.1} parent=93 // pred_region
              _
            $region109: #{equivariant_product_basis_block.1} parent=93 // pred_fallthru
              _
          $region94: #{equivariant_product_basis_block.1} parent=89 // pred_fallthru
            _
          %2904 = vnop
        $region90: #{equivariant_product_basis_block.1} parent=77 // pred_fallthru
          _
      $region78: #{equivariant_product_basis_block.1} parent=5 // pred_fallthru
        _
      %p2905 = scmp.le.s32.totalorder 2, %s11
      // Predicated region
      $region110: #{equivariant_product_basis_block.1} parent=5 // pred_check
        %p2906 = pneg %p2905
      $region111: #{equivariant_product_basis_block.1} parent=5 // pred_check_branch
        %2908 = sbr.rel (%p2906) target = $region113
      $region112: #{equivariant_product_basis_block.1} parent=5 // pred_region
        %s2909 = ssub.s32 %s11, 2
        // Predicated region
        $region114: #{equivariant_product_basis_block.1} parent=112 // pred_check
          %p2910 = pneg %p160
        $region115: #{equivariant_product_basis_block.1} parent=112 // pred_check_branch
          %2912 = sbr.rel (%p2910) target = $region117
        $region116: #{equivariant_product_basis_block.1} parent=112 // pred_region
          %s2913 = sand.u32 %s145, 1
          %s2914 = sand.u32 %s145, 1
          %s2915 = smul.addr %s2914, 32
          %s2916 = scalar_lea.vmem [#allocation4], %s2915
        $region117: #{equivariant_product_basis_block.1} parent=112 // pred_fallthru
          _
      $region113: #{equivariant_product_basis_block.1} parent=5 // pred_fallthru
        _
    $region6: #{equivariant_product_basis_block.1} parent=1 // loop_footer
      %s15 = sadd.s32 1, %s11
    $region7: #{equivariant_product_basis_block.1} parent=1 // loop_footer_branch
      %10 = sbr.rel target = $region3
    $region8: #{equivariant_product_basis_block.1} parent=1 // loop_exit
      _

</llo_original>
